<compile_context>
chip_gen: v7x
topology: tpu7x:2x2x1
jax: 0.10.0
libtpu: 0.0.40
codegen_flags: <defaults>
</compile_context>

<pallas_src>
import functools

import jax
import jax.numpy as jnp
from jax.experimental import pallas as pl
from jax.experimental.pallas import tpu as pltpu

# Real (in_features, out_features) of the six nn.Linear layers.
DIMS = [(784, 256), (256, 64), (64, 20),      # encoder
        (20, 64), (64, 256), (256, 784)]      # decoder

# Lane-aligned padded dims.  Input 784 -> 896 (=7*128); hidden 64/20 -> 128 so
# all intermediates are lane-dense.  The final output dim 784 is left
# UNPADDED so the kernel stores a (tb, 784) block directly (full minor dim is
# a legal block) and the wrapper never de-pads the feature dim.
PAD_IN = [896, 256, 128, 128, 128, 256]
PAD_OUT = [256, 128, 128, 128, 256, 784]

D_IN, D_IN_PAD, D_OUT = 784, 896, 784


def _round_up(x, m):
    return (x + m - 1) // m * m


def ae_kernel(x_ref,
              w1_ref, b1_ref, w2_ref, b2_ref, w3_ref, b3_ref,
              w4_ref, b4_ref, w5_ref, b5_ref, w6_ref, b6_ref,
              out_ref):
    """Full AE forward for one (TB, 896) bf16 batch tile (weights VMEM-resident)."""

    def dense(h_bf16, w_ref, b_ref):
        # bf16 operands on the MXU, f32 accumulation + f32 bias add.
        return jnp.dot(h_bf16, w_ref[...],
                       preferred_element_type=jnp.float32) + b_ref[...]

    def relu_bf16(y):
        # ReLU in f32, stored bf16 (relu∘cast == cast-before-next-matmul).
        return jnp.maximum(y, 0.0).astype(jnp.bfloat16)

    h = x_ref[...]                                   # (TB, 896) bf16
    # ---------------- encoder ----------------
    h = relu_bf16(dense(h, w1_ref, b1_ref))          # (TB, 256)
    h = relu_bf16(dense(h, w2_ref, b2_ref))          # (TB, 128)  (64 real)
    h = relu_bf16(dense(h, w3_ref, b3_ref))          # (TB, 128)  latent (20 real)
    # ---------------- decoder ----------------
    h = relu_bf16(dense(h, w4_ref, b4_ref))          # (TB, 128)  (64 real)
    h = relu_bf16(dense(h, w5_ref, b5_ref))          # (TB, 256)
    y = dense(h, w6_ref, b6_ref)                     # (TB, 784)  f32
    # sigmoid(y) == 0.5*tanh(0.5*y) + 0.5  -> single EUP transcendental.
    out_ref[...] = (0.5 * jnp.tanh(0.5 * y) + 0.5).astype(out_ref.dtype)


def prepare_params(torch_params, weight_dtype=jnp.bfloat16):
    """torch_params: list of (w, b) in nn.Linear layout w:(out,in), b:(out,).

    Returns padded, transposed weights (in_pad, out_pad) in `weight_dtype`
    and padded f32 biases (1, out_pad).  Zero padding keeps results exact.
    """
    prepped = []
    for li, (w, b) in enumerate(torch_params):
        out_f, in_f = w.shape
        k_pad, n_pad = PAD_IN[li], PAD_OUT[li]
        w_t = jnp.zeros((k_pad, n_pad), weight_dtype)
        w_t = w_t.at[:in_f, :out_f].set(jnp.asarray(w).T.astype(weight_dtype))
        b_p = jnp.zeros((1, n_pad), jnp.float32)
        b_p = b_p.at[:, :out_f].set(jnp.asarray(b, jnp.float32)[None, :])
        prepped.append((w_t, b_p))
    return prepped


@functools.partial(jax.jit, static_argnames=("block_b",))
def ae_forward(x_nchw, prepped_params, block_b=512):
    """x_nchw: (B, 1, 28, 28) f32 -> (B, 1, 28, 28) f32."""
    B = x_nchw.shape[0]

    # Fold the bf16 cast into the one padding copy (input streams as bf16).
    x2d = x_nchw.reshape(B, D_IN).astype(jnp.bfloat16)

    # Batch tile: multiple of 8 sublanes, capped at block_b, sized so the grid
    # has >=2 tiles whenever possible (so v7x's "parallel" axis feeds both TCs).
    tb = max(8, min(block_b, _round_up((B + 1) // 2, 8)))
    b_pad = _round_up(B, tb)
    x_pad = jnp.zeros((b_pad, D_IN_PAD), jnp.bfloat16).at[:B, :D_IN].set(x2d)

    grid = (b_pad // tb,)

    flat_args = [x_pad]
    in_specs = [pl.BlockSpec((tb, D_IN_PAD), lambda i: (i, 0))]
    weight_bytes = 0
    for (w, b) in prepped_params:
        flat_args += [w, b]
        # Constant index_map -> block never changes -> DMA'd once, stays
        # resident in VMEM across all batch tiles.
        in_specs += [pl.BlockSpec(w.shape, lambda i: (0, 0)),
                     pl.BlockSpec(b.shape, lambda i: (0, 0))]
        weight_bytes += w.size * w.dtype.itemsize + b.size * b.dtype.itemsize

    flops = 2 * b_pad * sum(k * n for k, n in zip(PAD_IN, PAD_OUT))
    bytes_accessed = x_pad.size * 2 + b_pad * D_OUT * 4 + weight_bytes

    out = pl.pallas_call(
        ae_kernel,
        out_shape=jax.ShapeDtypeStruct((b_pad, D_OUT), jnp.float32),
        grid=grid,
        in_specs=in_specs,
        # Full minor dim (784) -> no de-pad pass; only the last vreg store
        # per row group is masked.
        out_specs=pl.BlockSpec((tb, D_OUT), lambda i: (i, 0)),
        compiler_params=pltpu.CompilerParams(
            dimension_semantics=("parallel",),        # v7x: shard tiles over 2 TCs
            vmem_limit_bytes=32 * 1024 * 1024),       # headroom past v5e's 16 MiB default
        cost_estimate=pl.CostEstimate(
            flops=flops,
            transcendentals=b_pad * D_OUT,
            bytes_accessed=bytes_accessed),
    )(*flat_args)

    # Only the (cheap) leading-dim batch padding is sliced off.
    return out[:B].reshape(B, 1, 28, 28)


def init_params(key):
    """Deterministic init in PyTorch nn.Linear layout: w (out,in), b (out,)."""
    params = []
    for (fan_in, fan_out) in DIMS:
        key, kw, kb = jax.random.split(key, 3)
        bound = 1.0 / jnp.sqrt(fan_in)
        w = jax.random.uniform(kw, (fan_out, fan_in), jnp.float32, -bound, bound)
        b = jax.random.uniform(kb, (fan_out,), jnp.float32, -bound, bound)
        params.append((w, b))
    return params


def ae_reference_f32(x_nchw, torch_params):
    """Pure-JAX f32 reference (exact PyTorch semantics)."""
    B = x_nchw.shape[0]
    h = x_nchw.reshape(B, 784)
    acts = [jax.nn.relu] * 5 + [jax.nn.sigmoid]
    for (w, b), act in zip(torch_params, acts):
        h = act(h @ w.T + b)
    return h.reshape(B, 1, 28, 28)


def ae_reference_bf16(x_nchw, torch_params):
    """Pure-JAX reference matching the kernel precision (bf16 matmul/activations, f32 acc)."""
    B = x_nchw.shape[0]
    h = x_nchw.reshape(B, 784).astype(jnp.bfloat16)
    for i, (w, b) in enumerate(torch_params):
        y = jnp.dot(h, w.T.astype(jnp.bfloat16),
                    preferred_element_type=jnp.float32) + b.astype(jnp.float32)
        if i < 5:
            h = jax.nn.relu(y).astype(jnp.bfloat16)
        else:
            h = jax.nn.sigmoid(y)
    return h.reshape(B, 1, 28, 28)


if __name__ == "__main__":
    key = jax.random.PRNGKey(0)
    key, kx = jax.random.split(key)

    B = 2
    x = jax.random.normal(kx, (B, 1, 28, 28), jnp.float32)

    params = init_params(key)
    prepped = prepare_params(params)

    out = ae_forward(x, prepped)
    out = jax.block_until_ready(out)
    assert out.shape == (B, 1, 28, 28), out.shape

    ref_bf16 = ae_reference_bf16(x, params)   # same matmul precision as kernel
    ref_f32 = ae_reference_f32(x, params)     # original f32 semantics
    err_bf16 = float(jnp.max(jnp.abs(out - ref_bf16)))
    err_f32 = float(jnp.max(jnp.abs(out - ref_f32)))
    assert err_bf16 < 2e-3, err_bf16
    assert err_f32 < 5e-2, err_f32

    print("KERNEL_OK")
</pallas_src>

<mosaic_0001>
module attributes {stable_mosaic.version = 11 : i64} {
  func.func @ae_kernel(%arg0: i32, %arg1: memref<8x896xbf16, #tpu.memory_space<vmem>>, %arg2: memref<896x256xbf16, #tpu.memory_space<vmem>>, %arg3: memref<1x256xf32, #tpu.memory_space<vmem>>, %arg4: memref<256x128xbf16, #tpu.memory_space<vmem>>, %arg5: memref<1x128xf32, #tpu.memory_space<vmem>>, %arg6: memref<128x128xbf16, #tpu.memory_space<vmem>>, %arg7: memref<1x128xf32, #tpu.memory_space<vmem>>, %arg8: memref<128x128xbf16, #tpu.memory_space<vmem>>, %arg9: memref<1x128xf32, #tpu.memory_space<vmem>>, %arg10: memref<128x256xbf16, #tpu.memory_space<vmem>>, %arg11: memref<1x256xf32, #tpu.memory_space<vmem>>, %arg12: memref<256x784xbf16, #tpu.memory_space<vmem>>, %arg13: memref<1x784xf32, #tpu.memory_space<vmem>>, %arg14: memref<8x784xf32, #tpu.memory_space<vmem>>) attributes {dimension_semantics = [#tpu.dimension_semantics<parallel>], iteration_bounds = array<i64: 1>, scalar_prefetch = 0 : i64, scratch_operands = 0 : i64, tpu.core_type = #tpu.core_type<tc>, window_params = [{transform_indices = @transform_0, window_bounds = array<i64: 8, 896>}, {pipeline_mode = #tpu.pipeline_mode<synchronous>, transform_indices = @transform_1, window_bounds = array<i64: 896, 256>}, {pipeline_mode = #tpu.pipeline_mode<synchronous>, transform_indices = @transform_2, window_bounds = array<i64: 1, 256>}, {pipeline_mode = #tpu.pipeline_mode<synchronous>, transform_indices = @transform_3, window_bounds = array<i64: 256, 128>}, {pipeline_mode = #tpu.pipeline_mode<synchronous>, transform_indices = @transform_4, window_bounds = array<i64: 1, 128>}, {pipeline_mode = #tpu.pipeline_mode<synchronous>, transform_indices = @transform_5, window_bounds = array<i64: 128, 128>}, {pipeline_mode = #tpu.pipeline_mode<synchronous>, transform_indices = @transform_6, window_bounds = array<i64: 1, 128>}, {pipeline_mode = #tpu.pipeline_mode<synchronous>, transform_indices = @transform_7, window_bounds = array<i64: 128, 128>}, {pipeline_mode = #tpu.pipeline_mode<synchronous>, transform_indices = @transform_8, window_bounds = array<i64: 1, 128>}, {pipeline_mode = #tpu.pipeline_mode<synchronous>, transform_indices = @transform_9, window_bounds = array<i64: 128, 256>}, {pipeline_mode = #tpu.pipeline_mode<synchronous>, transform_indices = @transform_10, window_bounds = array<i64: 1, 256>}, {pipeline_mode = #tpu.pipeline_mode<synchronous>, transform_indices = @transform_11, window_bounds = array<i64: 256, 784>}, {pipeline_mode = #tpu.pipeline_mode<synchronous>, transform_indices = @transform_12, window_bounds = array<i64: 1, 784>}, {transform_indices = @transform_13, window_bounds = array<i64: 8, 784>}]} {
    %c0 = arith.constant 0 : index
    %c0_0 = arith.constant 0 : index
    %0 = vector.load %arg1[%c0, %c0_0] : memref<8x896xbf16, #tpu.memory_space<vmem>>, vector<8x896xbf16>
    %c0_1 = arith.constant 0 : index
    %c0_2 = arith.constant 0 : index
    %1 = vector.load %arg2[%c0_1, %c0_2] : memref<896x256xbf16, #tpu.memory_space<vmem>>, vector<896x256xbf16>
    %cst = arith.constant dense<0.000000e+00> : vector<8x256xf32>
    %2 = tpu.matmul %0, %1, %cst {dimension_numbers = #tpu.dot_dimension_numbers<[1], [0], [0], [1], [0, 0, 1, 1], [], []>} : vector<8x896xbf16>, vector<896x256xbf16>, vector<8x256xf32> -> vector<8x256xf32>
    %c0_3 = arith.constant 0 : index
    %c0_4 = arith.constant 0 : index
    %3 = vector.load %arg3[%c0_3, %c0_4] : memref<1x256xf32, #tpu.memory_space<vmem>>, vector<1x256xf32>
    %4 = vector.broadcast %3 : vector<1x256xf32> to vector<8x256xf32>
    %5 = arith.addf %2, %4 : vector<8x256xf32>
    %cst_5 = arith.constant 0.000000e+00 : f32
    %6 = vector.broadcast %cst_5 : f32 to vector<8x256xf32>
    %7 = arith.maximumf %5, %6 : vector<8x256xf32>
    %8 = arith.truncf %7 : vector<8x256xf32> to vector<8x256xbf16>
    %c0_6 = arith.constant 0 : index
    %c0_7 = arith.constant 0 : index
    %9 = vector.load %arg4[%c0_6, %c0_7] : memref<256x128xbf16, #tpu.memory_space<vmem>>, vector<256x128xbf16>
    %cst_8 = arith.constant dense<0.000000e+00> : vector<8x128xf32>
    %10 = tpu.matmul %8, %9, %cst_8 {dimension_numbers = #tpu.dot_dimension_numbers<[1], [0], [0], [1], [0, 0, 1, 1], [], []>} : vector<8x256xbf16>, vector<256x128xbf16>, vector<8x128xf32> -> vector<8x128xf32>
    %c0_9 = arith.constant 0 : index
    %c0_10 = arith.constant 0 : index
    %11 = vector.load %arg5[%c0_9, %c0_10] : memref<1x128xf32, #tpu.memory_space<vmem>>, vector<1x128xf32>
    %12 = vector.broadcast %11 : vector<1x128xf32> to vector<8x128xf32>
    %13 = arith.addf %10, %12 : vector<8x128xf32>
    %cst_11 = arith.constant 0.000000e+00 : f32
    %14 = vector.broadcast %cst_11 : f32 to vector<8x128xf32>
    %15 = arith.maximumf %13, %14 : vector<8x128xf32>
    %16 = arith.truncf %15 : vector<8x128xf32> to vector<8x128xbf16>
    %c0_12 = arith.constant 0 : index
    %c0_13 = arith.constant 0 : index
    %17 = vector.load %arg6[%c0_12, %c0_13] : memref<128x128xbf16, #tpu.memory_space<vmem>>, vector<128x128xbf16>
    %cst_14 = arith.constant dense<0.000000e+00> : vector<8x128xf32>
    %18 = tpu.matmul %16, %17, %cst_14 {dimension_numbers = #tpu.dot_dimension_numbers<[1], [0], [0], [1], [0, 0, 1, 1], [], []>} : vector<8x128xbf16>, vector<128x128xbf16>, vector<8x128xf32> -> vector<8x128xf32>
    %c0_15 = arith.constant 0 : index
    %c0_16 = arith.constant 0 : index
    %19 = vector.load %arg7[%c0_15, %c0_16] : memref<1x128xf32, #tpu.memory_space<vmem>>, vector<1x128xf32>
    %20 = vector.broadcast %19 : vector<1x128xf32> to vector<8x128xf32>
    %21 = arith.addf %18, %20 : vector<8x128xf32>
    %cst_17 = arith.constant 0.000000e+00 : f32
    %22 = vector.broadcast %cst_17 : f32 to vector<8x128xf32>
    %23 = arith.maximumf %21, %22 : vector<8x128xf32>
    %24 = arith.truncf %23 : vector<8x128xf32> to vector<8x128xbf16>
    %c0_18 = arith.constant 0 : index
    %c0_19 = arith.constant 0 : index
    %25 = vector.load %arg8[%c0_18, %c0_19] : memref<128x128xbf16, #tpu.memory_space<vmem>>, vector<128x128xbf16>
    %cst_20 = arith.constant dense<0.000000e+00> : vector<8x128xf32>
    %26 = tpu.matmul %24, %25, %cst_20 {dimension_numbers = #tpu.dot_dimension_numbers<[1], [0], [0], [1], [0, 0, 1, 1], [], []>} : vector<8x128xbf16>, vector<128x128xbf16>, vector<8x128xf32> -> vector<8x128xf32>
    %c0_21 = arith.constant 0 : index
    %c0_22 = arith.constant 0 : index
    %27 = vector.load %arg9[%c0_21, %c0_22] : memref<1x128xf32, #tpu.memory_space<vmem>>, vector<1x128xf32>
    %28 = vector.broadcast %27 : vector<1x128xf32> to vector<8x128xf32>
    %29 = arith.addf %26, %28 : vector<8x128xf32>
    %cst_23 = arith.constant 0.000000e+00 : f32
    %30 = vector.broadcast %cst_23 : f32 to vector<8x128xf32>
    %31 = arith.maximumf %29, %30 : vector<8x128xf32>
    %32 = arith.truncf %31 : vector<8x128xf32> to vector<8x128xbf16>
    %c0_24 = arith.constant 0 : index
    %c0_25 = arith.constant 0 : index
    %33 = vector.load %arg10[%c0_24, %c0_25] : memref<128x256xbf16, #tpu.memory_space<vmem>>, vector<128x256xbf16>
    %cst_26 = arith.constant dense<0.000000e+00> : vector<8x256xf32>
    %34 = tpu.matmul %32, %33, %cst_26 {dimension_numbers = #tpu.dot_dimension_numbers<[1], [0], [0], [1], [0, 0, 1, 1], [], []>} : vector<8x128xbf16>, vector<128x256xbf16>, vector<8x256xf32> -> vector<8x256xf32>
    %c0_27 = arith.constant 0 : index
    %c0_28 = arith.constant 0 : index
    %35 = vector.load %arg11[%c0_27, %c0_28] : memref<1x256xf32, #tpu.memory_space<vmem>>, vector<1x256xf32>
    %36 = vector.broadcast %35 : vector<1x256xf32> to vector<8x256xf32>
    %37 = arith.addf %34, %36 : vector<8x256xf32>
    %cst_29 = arith.constant 0.000000e+00 : f32
    %38 = vector.broadcast %cst_29 : f32 to vector<8x256xf32>
    %39 = arith.maximumf %37, %38 : vector<8x256xf32>
    %40 = arith.truncf %39 : vector<8x256xf32> to vector<8x256xbf16>
    %c0_30 = arith.constant 0 : index
    %c0_31 = arith.constant 0 : index
    %41 = vector.load %arg12[%c0_30, %c0_31] : memref<256x784xbf16, #tpu.memory_space<vmem>>, vector<256x784xbf16>
    %cst_32 = arith.constant dense<0.000000e+00> : vector<8x784xf32>
    %42 = tpu.matmul %40, %41, %cst_32 {dimension_numbers = #tpu.dot_dimension_numbers<[1], [0], [0], [1], [0, 0, 1, 1], [], []>} : vector<8x256xbf16>, vector<256x784xbf16>, vector<8x784xf32> -> vector<8x784xf32>
    %c0_33 = arith.constant 0 : index
    %c0_34 = arith.constant 0 : index
    %43 = vector.load %arg13[%c0_33, %c0_34] : memref<1x784xf32, #tpu.memory_space<vmem>>, vector<1x784xf32>
    %44 = vector.broadcast %43 : vector<1x784xf32> to vector<8x784xf32>
    %45 = arith.addf %42, %44 : vector<8x784xf32>
    %cst_35 = arith.constant 5.000000e-01 : f32
    %46 = vector.broadcast %cst_35 : f32 to vector<8x784xf32>
    %47 = arith.mulf %46, %45 : vector<8x784xf32>
    %48 = math.tanh %47 : vector<8x784xf32>
    %cst_36 = arith.constant 5.000000e-01 : f32
    %49 = vector.broadcast %cst_36 : f32 to vector<8x784xf32>
    %50 = arith.mulf %49, %48 : vector<8x784xf32>
    %cst_37 = arith.constant 5.000000e-01 : f32
    %51 = vector.broadcast %cst_37 : f32 to vector<8x784xf32>
    %52 = arith.addf %50, %51 : vector<8x784xf32>
    %c0_38 = arith.constant 0 : index
    %c0_39 = arith.constant 0 : index
    %53 = vector.load %arg14[%c0_38, %c0_39] : memref<8x784xf32, #tpu.memory_space<vmem>>, vector<8x784xf32>
    tpu.vector_store %arg14[%c0_38, %c0_39], %52 {strides = array<i32>} : memref<8x784xf32, #tpu.memory_space<vmem>>, vector<8x784xf32>,
    return
  }
  func.func @transform_0(%arg0: i32) -> (i32, i32) {
    %c0_i32 = arith.constant 0 : i32
    %c0_i32_0 = arith.constant 0 : i32
    return %arg0, %c0_i32 : i32, i32
  }
  func.func @transform_1(%arg0: i32) -> (i32, i32) {
    %c0_i32 = arith.constant 0 : i32
    %c0_i32_0 = arith.constant 0 : i32
    %c0_i32_1 = arith.constant 0 : i32
    return %c0_i32, %c0_i32_0 : i32, i32
  }
  func.func @transform_2(%arg0: i32) -> (i32, i32) {
    %c0_i32 = arith.constant 0 : i32
    %c0_i32_0 = arith.constant 0 : i32
    %c0_i32_1 = arith.constant 0 : i32
    return %c0_i32, %c0_i32_0 : i32, i32
  }
  func.func @transform_3(%arg0: i32) -> (i32, i32) {
    %c0_i32 = arith.constant 0 : i32
    %c0_i32_0 = arith.constant 0 : i32
    %c0_i32_1 = arith.constant 0 : i32
    return %c0_i32, %c0_i32_0 : i32, i32
  }
  func.func @transform_4(%arg0: i32) -> (i32, i32) {
    %c0_i32 = arith.constant 0 : i32
    %c0_i32_0 = arith.constant 0 : i32
    %c0_i32_1 = arith.constant 0 : i32
    return %c0_i32, %c0_i32_0 : i32, i32
  }
  func.func @transform_5(%arg0: i32) -> (i32, i32) {
    %c0_i32 = arith.constant 0 : i32
    %c0_i32_0 = arith.constant 0 : i32
    %c0_i32_1 = arith.constant 0 : i32
    return %c0_i32, %c0_i32_0 : i32, i32
  }
  func.func @transform_6(%arg0: i32) -> (i32, i32) {
    %c0_i32 = arith.constant 0 : i32
    %c0_i32_0 = arith.constant 0 : i32
    %c0_i32_1 = arith.constant 0 : i32
    return %c0_i32, %c0_i32_0 : i32, i32
  }
  func.func @transform_7(%arg0: i32) -> (i32, i32) {
    %c0_i32 = arith.constant 0 : i32
    %c0_i32_0 = arith.constant 0 : i32
    %c0_i32_1 = arith.constant 0 : i32
    return %c0_i32, %c0_i32_0 : i32, i32
  }
  func.func @transform_8(%arg0: i32) -> (i32, i32) {
    %c0_i32 = arith.constant 0 : i32
    %c0_i32_0 = arith.constant 0 : i32
    %c0_i32_1 = arith.constant 0 : i32
    return %c0_i32, %c0_i32_0 : i32, i32
  }
  func.func @transform_9(%arg0: i32) -> (i32, i32) {
    %c0_i32 = arith.constant 0 : i32
    %c0_i32_0 = arith.constant 0 : i32
    %c0_i32_1 = arith.constant 0 : i32
    return %c0_i32, %c0_i32_0 : i32, i32
  }
  func.func @transform_10(%arg0: i32) -> (i32, i32) {
    %c0_i32 = arith.constant 0 : i32
    %c0_i32_0 = arith.constant 0 : i32
    %c0_i32_1 = arith.constant 0 : i32
    return %c0_i32, %c0_i32_0 : i32, i32
  }
  func.func @transform_11(%arg0: i32) -> (i32, i32) {
    %c0_i32 = arith.constant 0 : i32
    %c0_i32_0 = arith.constant 0 : i32
    %c0_i32_1 = arith.constant 0 : i32
    return %c0_i32, %c0_i32_0 : i32, i32
  }
  func.func @transform_12(%arg0: i32) -> (i32, i32) {
    %c0_i32 = arith.constant 0 : i32
    %c0_i32_0 = arith.constant 0 : i32
    %c0_i32_1 = arith.constant 0 : i32
    return %c0_i32, %c0_i32_0 : i32, i32
  }
  func.func @transform_13(%arg0: i32) -> (i32, i32) {
    %c0_i32 = arith.constant 0 : i32
    %c0_i32_0 = arith.constant 0 : i32
    return %arg0, %c0_i32 : i32, i32
  }
}

</mosaic_0001>

<llo_original>
// kernel: ae_forward.1
$region0: #{ae_forward.1}
  #allocation0 [shape = 'u32[]', space=smem, size = 0x4, offset = 0x4, fixed_abs, tag = 'smem constant byte address 0x4 - core index']
  #allocation1 [shape = 'u32[144,128]{1,0:T(1,128)}', space=vmem, size = 0x12000, scoped, tag = 'internal scratch']
  %s0 = inlined_call_operand.vmem [shape: bf16[8,896], index: 0, kind: input, shape index: {}]
  %s1 = inlined_call_operand.vmem [shape: bf16[896,256], index: 1, kind: input, shape index: {}]
  %s2 = inlined_call_operand.vmem [shape: f32[1,256], index: 2, kind: input, shape index: {}]
  %s3 = inlined_call_operand.vmem [shape: bf16[256,128], index: 3, kind: input, shape index: {}]
  %s4 = inlined_call_operand.vmem [shape: f32[1,128], index: 4, kind: input, shape index: {}]
  %s5 = inlined_call_operand.vmem [shape: bf16[128,128], index: 5, kind: input, shape index: {}]
  %s6 = inlined_call_operand.vmem [shape: f32[1,128], index: 6, kind: input, shape index: {}]
  %s7 = inlined_call_operand.vmem [shape: bf16[128,128], index: 7, kind: input, shape index: {}]
  %s8 = inlined_call_operand.vmem [shape: f32[1,128], index: 8, kind: input, shape index: {}]
  %s9 = inlined_call_operand.vmem [shape: bf16[128,256], index: 9, kind: input, shape index: {}]
  %s10 = inlined_call_operand.vmem [shape: f32[1,256], index: 10, kind: input, shape index: {}]
  %s11 = inlined_call_operand.vmem [shape: bf16[256,784], index: 11, kind: input, shape index: {}]
  %s12 = inlined_call_operand.vmem [shape: f32[1,784], index: 12, kind: input, shape index: {}]
  %s13 = inlined_call_operand.vmem [shape: f32[8,784], index: 13, kind: output, shape index: {}]
  %s14 = sld [smem:[#allocation0]]
  $region62: #{ae_forward.1} parent=0
    _
  %s16 = ssub.s32 1, %s14
  %s17 = scalar_select 0, %s16, %s14
  // Predicated region
  $region2: #{ae_forward.1} parent=0 // pred_check
    _
  $region3: #{ae_forward.1} parent=0 // pred_check_branch
    %19 = sbr.rel (0) target = $region5
  $region4: #{ae_forward.1} parent=0 // pred_region
    _
  $region5: #{ae_forward.1} parent=0 // pred_fallthru
    _
  // Predicated region
  $region6: #{ae_forward.1} parent=0 // pred_check
    _
  $region7: #{ae_forward.1} parent=0 // pred_check_branch
    %21 = sbr.rel (0) target = $region9
  $region8: #{ae_forward.1} parent=0 // pred_region
    _
  $region9: #{ae_forward.1} parent=0 // pred_fallthru
    _
  // Predicated region
  $region10: #{ae_forward.1} parent=0 // pred_check
    _
  $region11: #{ae_forward.1} parent=0 // pred_check_branch
    %23 = sbr.rel (0) target = $region13
  $region12: #{ae_forward.1} parent=0 // pred_region
    _
  $region13: #{ae_forward.1} parent=0 // pred_fallthru
    _
  // Predicated region
  $region14: #{ae_forward.1} parent=0 // pred_check
    _
  $region15: #{ae_forward.1} parent=0 // pred_check_branch
    %25 = sbr.rel (0) target = $region17
  $region16: #{ae_forward.1} parent=0 // pred_region
    _
  $region17: #{ae_forward.1} parent=0 // pred_fallthru
    _
  // Predicated region
  $region18: #{ae_forward.1} parent=0 // pred_check
    _
  $region19: #{ae_forward.1} parent=0 // pred_check_branch
    %27 = sbr.rel (0) target = $region21
  $region20: #{ae_forward.1} parent=0 // pred_region
    _
  $region21: #{ae_forward.1} parent=0 // pred_fallthru
    _
  // Predicated region
  $region22: #{ae_forward.1} parent=0 // pred_check
    _
  $region23: #{ae_forward.1} parent=0 // pred_check_branch
    %29 = sbr.rel (0) target = $region25
  $region24: #{ae_forward.1} parent=0 // pred_region
    _
  $region25: #{ae_forward.1} parent=0 // pred_fallthru
    _
  // Predicated region
  $region26: #{ae_forward.1} parent=0 // pred_check
    _
  $region27: #{ae_forward.1} parent=0 // pred_check_branch
    %31 = sbr.rel (0) target = $region29
  $region28: #{ae_forward.1} parent=0 // pred_region
    _
  $region29: #{ae_forward.1} parent=0 // pred_fallthru
    _
  // Predicated region
  $region30: #{ae_forward.1} parent=0 // pred_check
    _
  $region31: #{ae_forward.1} parent=0 // pred_check_branch
    %33 = sbr.rel (0) target = $region33
  $region32: #{ae_forward.1} parent=0 // pred_region
    _
  $region33: #{ae_forward.1} parent=0 // pred_fallthru
    _
  // Predicated region
  $region34: #{ae_forward.1} parent=0 // pred_check
    _
  $region35: #{ae_forward.1} parent=0 // pred_check_branch
    %35 = sbr.rel (0) target = $region37
  $region36: #{ae_forward.1} parent=0 // pred_region
    _
  $region37: #{ae_forward.1} parent=0 // pred_fallthru
    _
  // Predicated region
  $region38: #{ae_forward.1} parent=0 // pred_check
    _
  $region39: #{ae_forward.1} parent=0 // pred_check_branch
    %37 = sbr.rel (0) target = $region41
  $region40: #{ae_forward.1} parent=0 // pred_region
    _
  $region41: #{ae_forward.1} parent=0 // pred_fallthru
    _
  // Predicated region
  $region42: #{ae_forward.1} parent=0 // pred_check
    _
  $region43: #{ae_forward.1} parent=0 // pred_check_branch
    %39 = sbr.rel (0) target = $region45
  $region44: #{ae_forward.1} parent=0 // pred_region
    _
  $region45: #{ae_forward.1} parent=0 // pred_fallthru
    _
  // Predicated region
  $region46: #{ae_forward.1} parent=0 // pred_check
    _
  $region47: #{ae_forward.1} parent=0 // pred_check_branch
    %41 = sbr.rel (0) target = $region49
  $region48: #{ae_forward.1} parent=0 // pred_region
    _
  $region49: #{ae_forward.1} parent=0 // pred_fallthru
    _
  // Predicated region
  $region50: #{ae_forward.1} parent=0 // pred_check
    _
  $region51: #{ae_forward.1} parent=0 // pred_check_branch
    %43 = sbr.rel (0) target = $region53
  $region52: #{ae_forward.1} parent=0 // pred_region
    _
  $region53: #{ae_forward.1} parent=0 // pred_fallthru
    _
  %v45 = vld [vmem:[%s0] sm:$0xff]
  %v46 = vld [vmem:[%s0 + $0x8] sm:$0xff]
  %v47 = vld [vmem:[%s0 + $0x10] sm:$0xff]
  %v48 = vld [vmem:[%s0 + $0x18] sm:$0xf]
  %v49 = vld [vmem:[%s1] sm:$0xff]
  %v50 = vld [vmem:[%s1 + $0x8] sm:$0xff]
  %v51 = vld [vmem:[%s1 + $0x10] sm:$0xff]
  %v52 = vld [vmem:[%s1 + $0x18] sm:$0xff]
  %v53 = vld [vmem:[%s1 + $0x20] sm:$0xff]
  %v54 = vld [vmem:[%s1 + $0x28] sm:$0xff]
  %v55 = vld [vmem:[%s1 + $0x30] sm:$0xff]
  %v56 = vld [vmem:[%s1 + $0x38] sm:$0xff]
  %v57 = vld [vmem:[%s1 + $0x40] sm:$0xff]
  %v58 = vld [vmem:[%s1 + $0x48] sm:$0xff]
  %v59 = vld [vmem:[%s1 + $0x50] sm:$0xff]
  %v60 = vld [vmem:[%s1 + $0x58] sm:$0xff]
  %v61 = vld [vmem:[%s1 + $0x60] sm:$0xff]
  %v62 = vld [vmem:[%s1 + $0x68] sm:$0xff]
  %v63 = vld [vmem:[%s1 + $0x70] sm:$0xff]
  %v64 = vld [vmem:[%s1 + $0x78] sm:$0xff]
  %v65 = vld [vmem:[%s1 + $0x80] sm:$0xff]
  %v66 = vld [vmem:[%s1 + $0x88] sm:$0xff]
  %v67 = vld [vmem:[%s1 + $0x90] sm:$0xff]
  %v68 = vld [vmem:[%s1 + $0x98] sm:$0xff]
  %v69 = vld [vmem:[%s1 + $0xa0] sm:$0xff]
  %v70 = vld [vmem:[%s1 + $0xa8] sm:$0xff]
  %v71 = vld [vmem:[%s1 + $0xb0] sm:$0xff]
  %v72 = vld [vmem:[%s1 + $0xb8] sm:$0xff]
  %v73 = vld [vmem:[%s1 + $0xc0] sm:$0xff]
  %v74 = vld [vmem:[%s1 + $0xc8] sm:$0xff]
  %v75 = vld [vmem:[%s1 + $0xd0] sm:$0xff]
  %v76 = vld [vmem:[%s1 + $0xd8] sm:$0xff]
  %v77 = vld [vmem:[%s1 + $0xe0] sm:$0xff]
  %v78 = vld [vmem:[%s1 + $0xe8] sm:$0xff]
  %v79 = vld [vmem:[%s1 + $0xf0] sm:$0xff]
  %v80 = vld [vmem:[%s1 + $0xf8] sm:$0xff]
  %v81 = vld [vmem:[%s1 + $0x100] sm:$0xff]
  %v82 = vld [vmem:[%s1 + $0x108] sm:$0xff]
  %v83 = vld [vmem:[%s1 + $0x110] sm:$0xff]
  %v84 = vld [vmem:[%s1 + $0x118] sm:$0xff]
  %v85 = vld [vmem:[%s1 + $0x120] sm:$0xff]
  %v86 = vld [vmem:[%s1 + $0x128] sm:$0xff]
  %v87 = vld [vmem:[%s1 + $0x130] sm:$0xff]
  %v88 = vld [vmem:[%s1 + $0x138] sm:$0xff]
  %v89 = vld [vmem:[%s1 + $0x140] sm:$0xff]
  %v90 = vld [vmem:[%s1 + $0x148] sm:$0xff]
  %v91 = vld [vmem:[%s1 + $0x150] sm:$0xff]
  %v92 = vld [vmem:[%s1 + $0x158] sm:$0xff]
  %v93 = vld [vmem:[%s1 + $0x160] sm:$0xff]
  %v94 = vld [vmem:[%s1 + $0x168] sm:$0xff]
  %v95 = vld [vmem:[%s1 + $0x170] sm:$0xff]
  %v96 = vld [vmem:[%s1 + $0x178] sm:$0xff]
  %v97 = vld [vmem:[%s1 + $0x180] sm:$0xff]
  %v98 = vld [vmem:[%s1 + $0x188] sm:$0xff]
  %v99 = vld [vmem:[%s1 + $0x190] sm:$0xff]
  %v100 = vld [vmem:[%s1 + $0x198] sm:$0xff]
  %v101 = vld [vmem:[%s1 + $0x1a0] sm:$0xff]
  %v102 = vld [vmem:[%s1 + $0x1a8] sm:$0xff]
  %v103 = vld [vmem:[%s1 + $0x1b0] sm:$0xff]
  %v104 = vld [vmem:[%s1 + $0x1b8] sm:$0xff]
  %v105 = vld [vmem:[%s1 + $0x1c0] sm:$0xff]
  %v106 = vld [vmem:[%s1 + $0x1c8] sm:$0xff]
  %v107 = vld [vmem:[%s1 + $0x1d0] sm:$0xff]
  %v108 = vld [vmem:[%s1 + $0x1d8] sm:$0xff]
  %v109 = vld [vmem:[%s1 + $0x1e0] sm:$0xff]
  %v110 = vld [vmem:[%s1 + $0x1e8] sm:$0xff]
  %v111 = vld [vmem:[%s1 + $0x1f0] sm:$0xff]
  %v112 = vld [vmem:[%s1 + $0x1f8] sm:$0xff]
  %v113 = vld [vmem:[%s1 + $0x200] sm:$0xff]
  %v114 = vld [vmem:[%s1 + $0x208] sm:$0xff]
  %v115 = vld [vmem:[%s1 + $0x210] sm:$0xff]
  %v116 = vld [vmem:[%s1 + $0x218] sm:$0xff]
  %v117 = vld [vmem:[%s1 + $0x220] sm:$0xff]
  %v118 = vld [vmem:[%s1 + $0x228] sm:$0xff]
  %v119 = vld [vmem:[%s1 + $0x230] sm:$0xff]
  %v120 = vld [vmem:[%s1 + $0x238] sm:$0xff]
  %v121 = vld [vmem:[%s1 + $0x240] sm:$0xff]
  %v122 = vld [vmem:[%s1 + $0x248] sm:$0xff]
  %v123 = vld [vmem:[%s1 + $0x250] sm:$0xff]
  %v124 = vld [vmem:[%s1 + $0x258] sm:$0xff]
  %v125 = vld [vmem:[%s1 + $0x260] sm:$0xff]
  %v126 = vld [vmem:[%s1 + $0x268] sm:$0xff]
  %v127 = vld [vmem:[%s1 + $0x270] sm:$0xff]
  %v128 = vld [vmem:[%s1 + $0x278] sm:$0xff]
  %v129 = vld [vmem:[%s1 + $0x280] sm:$0xff]
  %v130 = vld [vmem:[%s1 + $0x288] sm:$0xff]
  %v131 = vld [vmem:[%s1 + $0x290] sm:$0xff]
  %v132 = vld [vmem:[%s1 + $0x298] sm:$0xff]
  %v133 = vld [vmem:[%s1 + $0x2a0] sm:$0xff]
  %v134 = vld [vmem:[%s1 + $0x2a8] sm:$0xff]
  %v135 = vld [vmem:[%s1 + $0x2b0] sm:$0xff]
  %v136 = vld [vmem:[%s1 + $0x2b8] sm:$0xff]
  %v137 = vld [vmem:[%s1 + $0x2c0] sm:$0xff]
  %v138 = vld [vmem:[%s1 + $0x2c8] sm:$0xff]
  %v139 = vld [vmem:[%s1 + $0x2d0] sm:$0xff]
  %v140 = vld [vmem:[%s1 + $0x2d8] sm:$0xff]
  %v141 = vld [vmem:[%s1 + $0x2e0] sm:$0xff]
  %v142 = vld [vmem:[%s1 + $0x2e8] sm:$0xff]
  %v143 = vld [vmem:[%s1 + $0x2f0] sm:$0xff]
  %v144 = vld [vmem:[%s1 + $0x2f8] sm:$0xff]
  %v145 = vld [vmem:[%s1 + $0x300] sm:$0xff]
  %v146 = vld [vmem:[%s1 + $0x308] sm:$0xff]
  %v147 = vld [vmem:[%s1 + $0x310] sm:$0xff]
  %v148 = vld [vmem:[%s1 + $0x318] sm:$0xff]
  %v149 = vld [vmem:[%s1 + $0x320] sm:$0xff]
  %v150 = vld [vmem:[%s1 + $0x328] sm:$0xff]
  %v151 = vld [vmem:[%s1 + $0x330] sm:$0xff]
  %v152 = vld [vmem:[%s1 + $0x338] sm:$0xff]
  %v153 = vld [vmem:[%s1 + $0x340] sm:$0xff]
  %v154 = vld [vmem:[%s1 + $0x348] sm:$0xff]
  %v155 = vld [vmem:[%s1 + $0x350] sm:$0xff]
  %v156 = vld [vmem:[%s1 + $0x358] sm:$0xff]
  %v157 = vld [vmem:[%s1 + $0x360] sm:$0xff]
  %v158 = vld [vmem:[%s1 + $0x368] sm:$0xff]
  %v159 = vld [vmem:[%s1 + $0x370] sm:$0xff]
  %v160 = vld [vmem:[%s1 + $0x378] sm:$0xff]
  %v161 = vld [vmem:[%s2] sm:$0x3]
  %v163 = vlaneseq
  %v164 = vshrl.u32 %v163, 7
  %v165 = vsub.s32 0, %v164
  %v166 = vrot.slane %v161, %v165
  %v167 = vlaneseq
  %v168 = vshrl.u32 %v167, 7
  %v169 = vsub.s32 1, %v168
  %v170 = vrot.slane %v161, %v169
  %v177 = vunpack.c.l.b16 %v45
  %v178 = vunpack.c.h.b16 %v45
  %v179 = vunpack.c.l.b16 %v46
  %v180 = vunpack.c.h.b16 %v46
  %v181 = vunpack.c.l.b16 %v47
  %v182 = vunpack.c.h.b16 %v47
  %v183 = vunpack.c.l.b16 %v48
  %v184 = vpack.c.b16 %v177, %v177
  %v185 = vpack.c.b16 %v178, %v178
  %v186 = vpack.c.b16 %v179, %v179
  %v187 = vpack.c.b16 %v180, %v180
  %v188 = vpack.c.b16 %v181, %v181
  %v189 = vpack.c.b16 %v182, %v182
  %v190 = vpack.c.b16 %v183, %v183
  %v310 = vunpack.c.l.b16 %v49
  %v311 = vunpack.c.h.b16 %v49
  %v312 = vunpack.c.l.b16 %v50
  %v313 = vunpack.c.h.b16 %v50
  %v314 = vunpack.c.l.b16 %v51
  %v315 = vunpack.c.h.b16 %v51
  %v316 = vunpack.c.l.b16 %v52
  %v317 = vunpack.c.h.b16 %v52
  %v318 = vunpack.c.l.b16 %v53
  %v319 = vunpack.c.h.b16 %v53
  %v320 = vunpack.c.l.b16 %v54
  %v321 = vunpack.c.h.b16 %v54
  %v322 = vunpack.c.l.b16 %v55
  %v323 = vunpack.c.h.b16 %v55
  %v324 = vunpack.c.l.b16 %v56
  %v325 = vunpack.c.h.b16 %v56
  %v326 = vunpack.c.l.b16 %v57
  %v327 = vunpack.c.h.b16 %v57
  %v328 = vunpack.c.l.b16 %v58
  %v329 = vunpack.c.h.b16 %v58
  %v330 = vunpack.c.l.b16 %v59
  %v331 = vunpack.c.h.b16 %v59
  %v332 = vunpack.c.l.b16 %v60
  %v333 = vunpack.c.h.b16 %v60
  %v334 = vunpack.c.l.b16 %v61
  %v335 = vunpack.c.h.b16 %v61
  %v336 = vunpack.c.l.b16 %v62
  %v337 = vunpack.c.h.b16 %v62
  %v338 = vunpack.c.l.b16 %v63
  %v339 = vunpack.c.h.b16 %v63
  %v340 = vunpack.c.l.b16 %v64
  %v341 = vunpack.c.h.b16 %v64
  %v342 = vunpack.c.l.b16 %v65
  %v343 = vunpack.c.h.b16 %v65
  %v344 = vunpack.c.l.b16 %v66
  %v345 = vunpack.c.h.b16 %v66
  %v346 = vunpack.c.l.b16 %v67
  %v347 = vunpack.c.h.b16 %v67
  %v348 = vunpack.c.l.b16 %v68
  %v349 = vunpack.c.h.b16 %v68
  %v350 = vunpack.c.l.b16 %v69
  %v351 = vunpack.c.h.b16 %v69
  %v352 = vunpack.c.l.b16 %v70
  %v353 = vunpack.c.h.b16 %v70
  %v354 = vunpack.c.l.b16 %v71
  %v355 = vunpack.c.h.b16 %v71
  %v356 = vunpack.c.l.b16 %v72
  %v357 = vunpack.c.h.b16 %v72
  %v358 = vunpack.c.l.b16 %v73
  %v359 = vunpack.c.h.b16 %v73
  %v360 = vunpack.c.l.b16 %v74
  %v361 = vunpack.c.h.b16 %v74
  %v362 = vunpack.c.l.b16 %v75
  %v363 = vunpack.c.h.b16 %v75
  %v364 = vunpack.c.l.b16 %v76
  %v365 = vunpack.c.h.b16 %v76
  %v366 = vunpack.c.l.b16 %v77
  %v367 = vunpack.c.h.b16 %v77
  %v368 = vunpack.c.l.b16 %v78
  %v369 = vunpack.c.h.b16 %v78
  %v370 = vunpack.c.l.b16 %v79
  %v371 = vunpack.c.h.b16 %v79
  %v372 = vunpack.c.l.b16 %v80
  %v373 = vunpack.c.h.b16 %v80
  %v374 = vunpack.c.l.b16 %v81
  %v375 = vunpack.c.h.b16 %v81
  %v376 = vunpack.c.l.b16 %v82
  %v377 = vunpack.c.h.b16 %v82
  %v378 = vunpack.c.l.b16 %v83
  %v379 = vunpack.c.h.b16 %v83
  %v380 = vunpack.c.l.b16 %v84
  %v381 = vunpack.c.h.b16 %v84
  %v382 = vunpack.c.l.b16 %v85
  %v383 = vunpack.c.h.b16 %v85
  %v384 = vunpack.c.l.b16 %v86
  %v385 = vunpack.c.h.b16 %v86
  %v386 = vunpack.c.l.b16 %v87
  %v387 = vunpack.c.h.b16 %v87
  %v388 = vunpack.c.l.b16 %v88
  %v389 = vunpack.c.h.b16 %v88
  %v390 = vunpack.c.l.b16 %v89
  %v391 = vunpack.c.h.b16 %v89
  %v392 = vunpack.c.l.b16 %v90
  %v393 = vunpack.c.h.b16 %v90
  %v394 = vunpack.c.l.b16 %v91
  %v395 = vunpack.c.h.b16 %v91
  %v396 = vunpack.c.l.b16 %v92
  %v397 = vunpack.c.h.b16 %v92
  %v398 = vunpack.c.l.b16 %v93
  %v399 = vunpack.c.h.b16 %v93
  %v400 = vunpack.c.l.b16 %v94
  %v401 = vunpack.c.h.b16 %v94
  %v402 = vunpack.c.l.b16 %v95
  %v403 = vunpack.c.h.b16 %v95
  %v404 = vunpack.c.l.b16 %v96
  %v405 = vunpack.c.h.b16 %v96
  %v406 = vunpack.c.l.b16 %v97
  %v407 = vunpack.c.h.b16 %v97
  %v408 = vunpack.c.l.b16 %v98
  %v409 = vunpack.c.h.b16 %v98
  %v410 = vunpack.c.l.b16 %v99
  %v411 = vunpack.c.h.b16 %v99
  %v412 = vunpack.c.l.b16 %v100
  %v413 = vunpack.c.h.b16 %v100
  %v414 = vunpack.c.l.b16 %v101
  %v415 = vunpack.c.h.b16 %v101
  %v416 = vunpack.c.l.b16 %v102
  %v417 = vunpack.c.h.b16 %v102
  %v418 = vunpack.c.l.b16 %v103
  %v419 = vunpack.c.h.b16 %v103
  %v420 = vunpack.c.l.b16 %v104
  %v421 = vunpack.c.h.b16 %v104
  %v422 = vunpack.c.l.b16 %v105
  %v423 = vunpack.c.h.b16 %v105
  %v424 = vunpack.c.l.b16 %v106
  %v425 = vunpack.c.h.b16 %v106
  %v426 = vunpack.c.l.b16 %v107
  %v427 = vunpack.c.h.b16 %v107
  %v428 = vunpack.c.l.b16 %v108
  %v429 = vunpack.c.h.b16 %v108
  %v430 = vunpack.c.l.b16 %v109
  %v431 = vunpack.c.h.b16 %v109
  %v432 = vunpack.c.l.b16 %v110
  %v433 = vunpack.c.h.b16 %v110
  %v434 = vunpack.c.l.b16 %v111
  %v435 = vunpack.c.h.b16 %v111
  %v436 = vunpack.c.l.b16 %v112
  %v437 = vunpack.c.h.b16 %v112
  %v438 = vunpack.c.l.b16 %v113
  %v439 = vunpack.c.h.b16 %v113
  %v440 = vunpack.c.l.b16 %v114
  %v441 = vunpack.c.h.b16 %v114
  %v442 = vunpack.c.l.b16 %v115
  %v443 = vunpack.c.h.b16 %v115
  %v444 = vunpack.c.l.b16 %v116
  %v445 = vunpack.c.h.b16 %v116
  %v446 = vunpack.c.l.b16 %v117
  %v447 = vunpack.c.h.b16 %v117
  %v448 = vunpack.c.l.b16 %v118
  %v449 = vunpack.c.h.b16 %v118
  %v450 = vunpack.c.l.b16 %v119
  %v451 = vunpack.c.h.b16 %v119
  %v452 = vunpack.c.l.b16 %v120
  %v453 = vunpack.c.h.b16 %v120
  %v454 = vunpack.c.l.b16 %v121
  %v455 = vunpack.c.h.b16 %v121
  %v456 = vunpack.c.l.b16 %v122
  %v457 = vunpack.c.h.b16 %v122
  %v458 = vunpack.c.l.b16 %v123
  %v459 = vunpack.c.h.b16 %v123
  %v460 = vunpack.c.l.b16 %v124
  %v461 = vunpack.c.h.b16 %v124
  %v462 = vunpack.c.l.b16 %v125
  %v463 = vunpack.c.h.b16 %v125
  %v464 = vunpack.c.l.b16 %v126
  %v465 = vunpack.c.h.b16 %v126
  %v466 = vunpack.c.l.b16 %v127
  %v467 = vunpack.c.h.b16 %v127
  %v468 = vunpack.c.l.b16 %v128
  %v469 = vunpack.c.h.b16 %v128
  %v470 = vunpack.c.l.b16 %v129
  %v471 = vunpack.c.h.b16 %v129
  %v472 = vunpack.c.l.b16 %v130
  %v473 = vunpack.c.h.b16 %v130
  %v474 = vunpack.c.l.b16 %v131
  %v475 = vunpack.c.h.b16 %v131
  %v476 = vunpack.c.l.b16 %v132
  %v477 = vunpack.c.h.b16 %v132
  %v478 = vunpack.c.l.b16 %v133
  %v479 = vunpack.c.h.b16 %v133
  %v480 = vunpack.c.l.b16 %v134
  %v481 = vunpack.c.h.b16 %v134
  %v482 = vunpack.c.l.b16 %v135
  %v483 = vunpack.c.h.b16 %v135
  %v484 = vunpack.c.l.b16 %v136
  %v485 = vunpack.c.h.b16 %v136
  %v486 = vunpack.c.l.b16 %v137
  %v487 = vunpack.c.h.b16 %v137
  %v488 = vunpack.c.l.b16 %v138
  %v489 = vunpack.c.h.b16 %v138
  %v490 = vunpack.c.l.b16 %v139
  %v491 = vunpack.c.h.b16 %v139
  %v492 = vunpack.c.l.b16 %v140
  %v493 = vunpack.c.h.b16 %v140
  %v494 = vunpack.c.l.b16 %v141
  %v495 = vunpack.c.h.b16 %v141
  %v496 = vunpack.c.l.b16 %v142
  %v497 = vunpack.c.h.b16 %v142
  %v498 = vunpack.c.l.b16 %v143
  %v499 = vunpack.c.h.b16 %v143
  %v500 = vunpack.c.l.b16 %v144
  %v501 = vunpack.c.h.b16 %v144
  %v502 = vunpack.c.l.b16 %v145
  %v503 = vunpack.c.h.b16 %v145
  %v504 = vunpack.c.l.b16 %v146
  %v505 = vunpack.c.h.b16 %v146
  %v506 = vunpack.c.l.b16 %v147
  %v507 = vunpack.c.h.b16 %v147
  %v508 = vunpack.c.l.b16 %v148
  %v509 = vunpack.c.h.b16 %v148
  %v510 = vunpack.c.l.b16 %v149
  %v511 = vunpack.c.h.b16 %v149
  %v512 = vunpack.c.l.b16 %v150
  %v513 = vunpack.c.h.b16 %v150
  %v514 = vunpack.c.l.b16 %v151
  %v515 = vunpack.c.h.b16 %v151
  %v516 = vunpack.c.l.b16 %v152
  %v517 = vunpack.c.h.b16 %v152
  %v518 = vunpack.c.l.b16 %v153
  %v519 = vunpack.c.h.b16 %v153
  %v520 = vunpack.c.l.b16 %v154
  %v521 = vunpack.c.h.b16 %v154
  %v522 = vunpack.c.l.b16 %v155
  %v523 = vunpack.c.h.b16 %v155
  %v524 = vunpack.c.l.b16 %v156
  %v525 = vunpack.c.h.b16 %v156
  %v526 = vunpack.c.l.b16 %v157
  %v527 = vunpack.c.h.b16 %v157
  %v528 = vunpack.c.l.b16 %v158
  %v529 = vunpack.c.h.b16 %v158
  %v530 = vunpack.c.l.b16 %v159
  %v531 = vunpack.c.h.b16 %v159
  %v532 = vunpack.c.l.b16 %v160
  %v533 = vunpack.c.h.b16 %v160
  %v534 = vpack.c.b16 %v312, %v310
  %v535 = vpack.c.b16 %v313, %v311
  %v536 = vpack.c.b16 %v316, %v314
  %v537 = vpack.c.b16 %v317, %v315
  %v538 = vpack.c.b16 %v320, %v318
  %v539 = vpack.c.b16 %v321, %v319
  %v540 = vpack.c.b16 %v324, %v322
  %v541 = vpack.c.b16 %v325, %v323
  %v542 = vpack.c.b16 %v328, %v326
  %v543 = vpack.c.b16 %v329, %v327
  %v544 = vpack.c.b16 %v332, %v330
  %v545 = vpack.c.b16 %v333, %v331
  %v546 = vpack.c.b16 %v336, %v334
  %v547 = vpack.c.b16 %v337, %v335
  %v548 = vpack.c.b16 %v340, %v338
  %v549 = vpack.c.b16 %v341, %v339
  %v550 = vpack.c.b16 %v344, %v342
  %v551 = vpack.c.b16 %v345, %v343
  %v552 = vpack.c.b16 %v348, %v346
  %v553 = vpack.c.b16 %v349, %v347
  %v554 = vpack.c.b16 %v352, %v350
  %v555 = vpack.c.b16 %v353, %v351
  %v556 = vpack.c.b16 %v356, %v354
  %v557 = vpack.c.b16 %v357, %v355
  %v558 = vpack.c.b16 %v360, %v358
  %v559 = vpack.c.b16 %v361, %v359
  %v560 = vpack.c.b16 %v364, %v362
  %v561 = vpack.c.b16 %v365, %v363
  %v562 = vpack.c.b16 %v368, %v366
  %v563 = vpack.c.b16 %v369, %v367
  %v564 = vpack.c.b16 %v372, %v370
  %v565 = vpack.c.b16 %v373, %v371
  %v566 = vpack.c.b16 %v376, %v374
  %v567 = vpack.c.b16 %v377, %v375
  %v568 = vpack.c.b16 %v380, %v378
  %v569 = vpack.c.b16 %v381, %v379
  %v570 = vpack.c.b16 %v384, %v382
  %v571 = vpack.c.b16 %v385, %v383
  %v572 = vpack.c.b16 %v388, %v386
  %v573 = vpack.c.b16 %v389, %v387
  %v574 = vpack.c.b16 %v392, %v390
  %v575 = vpack.c.b16 %v393, %v391
  %v576 = vpack.c.b16 %v396, %v394
  %v577 = vpack.c.b16 %v397, %v395
  %v578 = vpack.c.b16 %v400, %v398
  %v579 = vpack.c.b16 %v401, %v399
  %v580 = vpack.c.b16 %v404, %v402
  %v581 = vpack.c.b16 %v405, %v403
  %v582 = vpack.c.b16 %v408, %v406
  %v583 = vpack.c.b16 %v409, %v407
  %v584 = vpack.c.b16 %v412, %v410
  %v585 = vpack.c.b16 %v413, %v411
  %v586 = vpack.c.b16 %v416, %v414
  %v587 = vpack.c.b16 %v417, %v415
  %v588 = vpack.c.b16 %v420, %v418
  %v589 = vpack.c.b16 %v421, %v419
  %v590 = vpack.c.b16 %v424, %v422
  %v591 = vpack.c.b16 %v425, %v423
  %v592 = vpack.c.b16 %v428, %v426
  %v593 = vpack.c.b16 %v429, %v427
  %v594 = vpack.c.b16 %v432, %v430
  %v595 = vpack.c.b16 %v433, %v431
  %v596 = vpack.c.b16 %v436, %v434
  %v597 = vpack.c.b16 %v437, %v435
  %v598 = vpack.c.b16 %v440, %v438
  %v599 = vpack.c.b16 %v441, %v439
  %v600 = vpack.c.b16 %v444, %v442
  %v601 = vpack.c.b16 %v445, %v443
  %v602 = vpack.c.b16 %v448, %v446
  %v603 = vpack.c.b16 %v449, %v447
  %v604 = vpack.c.b16 %v452, %v450
  %v605 = vpack.c.b16 %v453, %v451
  %v606 = vpack.c.b16 %v456, %v454
  %v607 = vpack.c.b16 %v457, %v455
  %v608 = vpack.c.b16 %v460, %v458
  %v609 = vpack.c.b16 %v461, %v459
  %v610 = vpack.c.b16 %v464, %v462
  %v611 = vpack.c.b16 %v465, %v463
  %v612 = vpack.c.b16 %v468, %v466
  %v613 = vpack.c.b16 %v469, %v467
  %v614 = vpack.c.b16 %v472, %v470
  %v615 = vpack.c.b16 %v473, %v471
  %v616 = vpack.c.b16 %v476, %v474
  %v617 = vpack.c.b16 %v477, %v475
  %v618 = vpack.c.b16 %v480, %v478
  %v619 = vpack.c.b16 %v481, %v479
  %v620 = vpack.c.b16 %v484, %v482
  %v621 = vpack.c.b16 %v485, %v483
  %v622 = vpack.c.b16 %v488, %v486
  %v623 = vpack.c.b16 %v489, %v487
  %v624 = vpack.c.b16 %v492, %v490
  %v625 = vpack.c.b16 %v493, %v491
  %v626 = vpack.c.b16 %v496, %v494
  %v627 = vpack.c.b16 %v497, %v495
  %v628 = vpack.c.b16 %v500, %v498
  %v629 = vpack.c.b16 %v501, %v499
  %v630 = vpack.c.b16 %v504, %v502
  %v631 = vpack.c.b16 %v505, %v503
  %v632 = vpack.c.b16 %v508, %v506
  %v633 = vpack.c.b16 %v509, %v507
  %v634 = vpack.c.b16 %v512, %v510
  %v635 = vpack.c.b16 %v513, %v511
  %v636 = vpack.c.b16 %v516, %v514
  %v637 = vpack.c.b16 %v517, %v515
  %v638 = vpack.c.b16 %v520, %v518
  %v639 = vpack.c.b16 %v521, %v519
  %v640 = vpack.c.b16 %v524, %v522
  %v641 = vpack.c.b16 %v525, %v523
  %v642 = vpack.c.b16 %v528, %v526
  %v643 = vpack.c.b16 %v529, %v527
  %v644 = vpack.c.b16 %v532, %v530
  %v645 = vpack.c.b16 %v533, %v531
  %758 = vmatprep.subr.bf16.mxu0 %v535
  %759 = vmatpush1.bf16.msra.mxu0 %v534
  %760 = vmatprep.subr.bf16.mxu0 %v537
  %761 = vmatpush1.bf16.msra.mxu0 %v536
  %762 = vmatprep.subr.bf16.mxu0 %v539
  %763 = vmatpush1.bf16.msra.mxu0 %v538
  %764 = vmatprep.subr.bf16.mxu0 %v541
  %765 = vmatpush1.bf16.msra.mxu0 %v540
  %766 = vmatprep.subr.bf16.mxu0 %v543
  %767 = vmatpush1.bf16.msra.mxu0 %v542
  %768 = vmatprep.subr.bf16.mxu0 %v545
  %769 = vmatpush1.bf16.msra.mxu0 %v544
  %770 = vmatprep.subr.bf16.mxu0 %v547
  %771 = vmatpush1.bf16.msra.mxu0 %v546
  %772 = vmatprep.subr.bf16.mxu0 %v549
  %773 = vmatpush1.bf16.msra.mxu0 %v548
  %774 = vmatprep.subr.bf16.mxu0 %v551
  %775 = vmatpush1.bf16.msra.mxu0 %v550
  %776 = vmatprep.subr.bf16.mxu0 %v553
  %777 = vmatpush1.bf16.msra.mxu0 %v552
  %778 = vmatprep.subr.bf16.mxu0 %v555
  %779 = vmatpush1.bf16.msra.mxu0 %v554
  %780 = vmatprep.subr.bf16.mxu0 %v557
  %781 = vmatpush1.bf16.msra.mxu0 %v556
  %782 = vmatprep.subr.bf16.mxu0 %v559
  %783 = vmatpush1.bf16.msra.mxu0 %v558
  %784 = vmatprep.subr.bf16.mxu0 %v561
  %785 = vmatpush1.bf16.msra.mxu0 %v560
  %786 = vmatprep.subr.bf16.mxu0 %v563
  %787 = vmatpush1.bf16.msra.mxu0 %v562
  %788 = vmatprep.subr.bf16.mxu0 %v565
  %789 = vmatpush1.bf16.msra.mxu0 %v564
  %790 = vmatprep.mubr.bf16.mxu0 %v185
  %791 = vmatmul.mubr.bf16.gmra.mrb[0].mxu0 %v184
  %v792 = vpop.f32.mrb[0].mxu0
  %v793 = vadd.f32 %v166, %v792
  %v794 = vpop.f32.mrb[0].mxu0
  %v795 = vadd.f32 %v170, %v794
  %v796 = vpop.f32.mrb[0].mxu0
  %v797 = vpop.f32.mrb[0].mxu0
  %798 = vdwg.mxu0
  %799 = vmatprep.subr.bf16.mxu0 %v567
  %800 = vmatpush1.bf16.msra.mxu0 %v566
  %801 = vmatprep.subr.bf16.mxu0 %v569
  %802 = vmatpush1.bf16.msra.mxu0 %v568
  %803 = vmatprep.subr.bf16.mxu0 %v571
  %804 = vmatpush1.bf16.msra.mxu0 %v570
  %805 = vmatprep.subr.bf16.mxu0 %v573
  %806 = vmatpush1.bf16.msra.mxu0 %v572
  %807 = vmatprep.subr.bf16.mxu0 %v575
  %808 = vmatpush1.bf16.msra.mxu0 %v574
  %809 = vmatprep.subr.bf16.mxu0 %v577
  %810 = vmatpush1.bf16.msra.mxu0 %v576
  %811 = vmatprep.subr.bf16.mxu0 %v579
  %812 = vmatpush1.bf16.msra.mxu0 %v578
  %813 = vmatprep.subr.bf16.mxu0 %v581
  %814 = vmatpush1.bf16.msra.mxu0 %v580
  %815 = vmatprep.subr.bf16.mxu0 %v583
  %816 = vmatpush1.bf16.msra.mxu0 %v582
  %817 = vmatprep.subr.bf16.mxu0 %v585
  %818 = vmatpush1.bf16.msra.mxu0 %v584
  %819 = vmatprep.subr.bf16.mxu0 %v587
  %820 = vmatpush1.bf16.msra.mxu0 %v586
  %821 = vmatprep.subr.bf16.mxu0 %v589
  %822 = vmatpush1.bf16.msra.mxu0 %v588
  %823 = vmatprep.subr.bf16.mxu0 %v591
  %824 = vmatpush1.bf16.msra.mxu0 %v590
  %825 = vmatprep.subr.bf16.mxu0 %v593
  %826 = vmatpush1.bf16.msra.mxu0 %v592
  %827 = vmatprep.subr.bf16.mxu0 %v595
  %828 = vmatpush1.bf16.msra.mxu0 %v594
  %829 = vmatprep.subr.bf16.mxu0 %v597
  %830 = vmatpush1.bf16.msra.mxu0 %v596
  %831 = vmatprep.mubr.bf16.mxu0 %v187
  %832 = vmatmul.mubr.bf16.gmra.mrb[0].mxu0 %v186
  %v833 = vpop.f32.mrb[0].mxu0
  %v834 = vadd.f32 %v793, %v833
  %v835 = vpop.f32.mrb[0].mxu0
  %v836 = vadd.f32 %v795, %v835
  %v837 = vpop.f32.mrb[0].mxu0
  %v838 = vpop.f32.mrb[0].mxu0
  %839 = vdwg.mxu0
  %840 = vmatprep.subr.bf16.mxu0 %v599
  %841 = vmatpush1.bf16.msra.mxu0 %v598
  %842 = vmatprep.subr.bf16.mxu0 %v601
  %843 = vmatpush1.bf16.msra.mxu0 %v600
  %844 = vmatprep.subr.bf16.mxu0 %v603
  %845 = vmatpush1.bf16.msra.mxu0 %v602
  %846 = vmatprep.subr.bf16.mxu0 %v605
  %847 = vmatpush1.bf16.msra.mxu0 %v604
  %848 = vmatprep.subr.bf16.mxu0 %v607
  %849 = vmatpush1.bf16.msra.mxu0 %v606
  %850 = vmatprep.subr.bf16.mxu0 %v609
  %851 = vmatpush1.bf16.msra.mxu0 %v608
  %852 = vmatprep.subr.bf16.mxu0 %v611
  %853 = vmatpush1.bf16.msra.mxu0 %v610
  %854 = vmatprep.subr.bf16.mxu0 %v613
  %855 = vmatpush1.bf16.msra.mxu0 %v612
  %856 = vmatprep.subr.bf16.mxu0 %v615
  %857 = vmatpush1.bf16.msra.mxu0 %v614
  %858 = vmatprep.subr.bf16.mxu0 %v617
  %859 = vmatpush1.bf16.msra.mxu0 %v616
  %860 = vmatprep.subr.bf16.mxu0 %v619
  %861 = vmatpush1.bf16.msra.mxu0 %v618
  %862 = vmatprep.subr.bf16.mxu0 %v621
  %863 = vmatpush1.bf16.msra.mxu0 %v620
  %864 = vmatprep.subr.bf16.mxu0 %v623
  %865 = vmatpush1.bf16.msra.mxu0 %v622
  %866 = vmatprep.subr.bf16.mxu0 %v625
  %867 = vmatpush1.bf16.msra.mxu0 %v624
  %868 = vmatprep.subr.bf16.mxu0 %v627
  %869 = vmatpush1.bf16.msra.mxu0 %v626
  %870 = vmatprep.subr.bf16.mxu0 %v629
  %871 = vmatpush1.bf16.msra.mxu0 %v628
  %872 = vmatprep.mubr.bf16.mxu0 %v189
  %873 = vmatmul.mubr.bf16.gmra.mrb[0].mxu0 %v188
  %v874 = vpop.f32.mrb[0].mxu0
  %v875 = vadd.f32 %v834, %v874
  %v876 = vpop.f32.mrb[0].mxu0
  %v877 = vadd.f32 %v836, %v876
  %v878 = vpop.f32.mrb[0].mxu0
  %v879 = vpop.f32.mrb[0].mxu0
  %880 = vdwg.mxu0
  %881 = vmatprep.subr.bf16.mxu0 %v631
  %882 = vmatpush1.bf16.msra.mxu0 %v630
  %883 = vmatprep.subr.bf16.mxu0 %v633
  %884 = vmatpush1.bf16.msra.mxu0 %v632
  %885 = vmatprep.subr.bf16.mxu0 %v635
  %886 = vmatpush1.bf16.msra.mxu0 %v634
  %887 = vmatprep.subr.bf16.mxu0 %v637
  %888 = vmatpush1.bf16.msra.mxu0 %v636
  %889 = vmatprep.subr.bf16.mxu0 %v639
  %890 = vmatpush1.bf16.msra.mxu0 %v638
  %891 = vmatprep.subr.bf16.mxu0 %v641
  %892 = vmatpush1.bf16.msra.mxu0 %v640
  %893 = vmatprep.subr.bf16.mxu0 %v643
  %894 = vmatpush1.bf16.msra.mxu0 %v642
  %895 = vmatprep.subr.bf16.mxu0 %v645
  %896 = vmatpush1.bf16.msra.mxu0 %v644
  %897 = vmatprep.subr.bf16.mxu0 0
  %898 = vmatpush1.bf16.msra.mxu0 0
  %899 = vmatprep.subr.bf16.mxu0 0
  %900 = vmatpush1.bf16.msra.mxu0 0
  %901 = vmatprep.subr.bf16.mxu0 0
  %902 = vmatpush1.bf16.msra.mxu0 0
  %903 = vmatprep.subr.bf16.mxu0 0
  %904 = vmatpush1.bf16.msra.mxu0 0
  %905 = vmatprep.subr.bf16.mxu0 0
  %906 = vmatpush1.bf16.msra.mxu0 0
  %907 = vmatprep.subr.bf16.mxu0 0
  %908 = vmatpush1.bf16.msra.mxu0 0
  %909 = vmatprep.subr.bf16.mxu0 0
  %910 = vmatpush1.bf16.msra.mxu0 0
  %911 = vmatprep.subr.bf16.mxu0 0
  %912 = vmatpush1.bf16.msra.mxu0 0
  %913 = vmatprep.mubr.bf16.mxu0 0
  %914 = vmatmul.mubr.bf16.gmra.mrb[0].mxu0 %v190
  %v915 = vpop.f32.mrb[0].mxu0
  %v916 = vadd.f32 %v875, %v915
  %v917 = vpop.f32.mrb[0].mxu0
  %v918 = vadd.f32 %v877, %v917
  %v919 = vpop.f32.mrb[0].mxu0
  %v920 = vpop.f32.mrb[0].mxu0
  %921 = vdwg.mxu0
  %v922 = vmax.f32 %v916, 0.0
  %v923 = vmax.f32 %v918, 0.0
  %v924 = vpack.c.bf16 %v922, %v922
  %v925 = vpack.c.bf16 %v923, %v923
  %v926 = vld [vmem:[%s3] sm:$0xf]
  %v927 = vld [vmem:[%s3 + $0x4] sm:$0xf]
  %v928 = vld [vmem:[%s3 + $0x8] sm:$0xf]
  %v929 = vld [vmem:[%s3 + $0xc] sm:$0xf]
  %v930 = vld [vmem:[%s3 + $0x10] sm:$0xf]
  %v931 = vld [vmem:[%s3 + $0x14] sm:$0xf]
  %v932 = vld [vmem:[%s3 + $0x18] sm:$0xf]
  %v933 = vld [vmem:[%s3 + $0x1c] sm:$0xf]
  %v934 = vld [vmem:[%s3 + $0x20] sm:$0xf]
  %v935 = vld [vmem:[%s3 + $0x24] sm:$0xf]
  %v936 = vld [vmem:[%s3 + $0x28] sm:$0xf]
  %v937 = vld [vmem:[%s3 + $0x2c] sm:$0xf]
  %v938 = vld [vmem:[%s3 + $0x30] sm:$0xf]
  %v939 = vld [vmem:[%s3 + $0x34] sm:$0xf]
  %v940 = vld [vmem:[%s3 + $0x38] sm:$0xf]
  %v941 = vld [vmem:[%s3 + $0x3c] sm:$0xf]
  %v942 = vld [vmem:[%s3 + $0x40] sm:$0xf]
  %v943 = vld [vmem:[%s3 + $0x44] sm:$0xf]
  %v944 = vld [vmem:[%s3 + $0x48] sm:$0xf]
  %v945 = vld [vmem:[%s3 + $0x4c] sm:$0xf]
  %v946 = vld [vmem:[%s3 + $0x50] sm:$0xf]
  %v947 = vld [vmem:[%s3 + $0x54] sm:$0xf]
  %v948 = vld [vmem:[%s3 + $0x58] sm:$0xf]
  %v949 = vld [vmem:[%s3 + $0x5c] sm:$0xf]
  %v950 = vld [vmem:[%s3 + $0x60] sm:$0xf]
  %v951 = vld [vmem:[%s3 + $0x64] sm:$0xf]
  %v952 = vld [vmem:[%s3 + $0x68] sm:$0xf]
  %v953 = vld [vmem:[%s3 + $0x6c] sm:$0xf]
  %v954 = vld [vmem:[%s3 + $0x70] sm:$0xf]
  %v955 = vld [vmem:[%s3 + $0x74] sm:$0xf]
  %v956 = vld [vmem:[%s3 + $0x78] sm:$0xf]
  %v957 = vld [vmem:[%s3 + $0x7c] sm:$0xf]
  %v958 = vld [vmem:[%s4] sm:$0x1]
  %v960 = vlaneseq
  %v961 = vshrl.u32 %v960, 7
  %v962 = vsub.s32 0, %v961
  %v963 = vrot.slane %v958, %v962
  %v997 = vunpack.c.l.b16 %v926
  %v998 = vunpack.c.l.b16 %v927
  %v999 = vunpack.c.l.b16 %v928
  %v1000 = vunpack.c.l.b16 %v929
  %v1001 = vunpack.c.l.b16 %v930
  %v1002 = vunpack.c.l.b16 %v931
  %v1003 = vunpack.c.l.b16 %v932
  %v1004 = vunpack.c.l.b16 %v933
  %v1005 = vunpack.c.l.b16 %v934
  %v1006 = vunpack.c.l.b16 %v935
  %v1007 = vunpack.c.l.b16 %v936
  %v1008 = vunpack.c.l.b16 %v937
  %v1009 = vunpack.c.l.b16 %v938
  %v1010 = vunpack.c.l.b16 %v939
  %v1011 = vunpack.c.l.b16 %v940
  %v1012 = vunpack.c.l.b16 %v941
  %v1013 = vunpack.c.l.b16 %v942
  %v1014 = vunpack.c.l.b16 %v943
  %v1015 = vunpack.c.l.b16 %v944
  %v1016 = vunpack.c.l.b16 %v945
  %v1017 = vunpack.c.l.b16 %v946
  %v1018 = vunpack.c.l.b16 %v947
  %v1019 = vunpack.c.l.b16 %v948
  %v1020 = vunpack.c.l.b16 %v949
  %v1021 = vunpack.c.l.b16 %v950
  %v1022 = vunpack.c.l.b16 %v951
  %v1023 = vunpack.c.l.b16 %v952
  %v1024 = vunpack.c.l.b16 %v953
  %v1025 = vunpack.c.l.b16 %v954
  %v1026 = vunpack.c.l.b16 %v955
  %v1027 = vunpack.c.l.b16 %v956
  %v1028 = vunpack.c.l.b16 %v957
  %v1029 = vpack.c.b16 %v998, %v997
  %v1030 = vpack.c.b16 %v1000, %v999
  %v1031 = vpack.c.b16 %v1002, %v1001
  %v1032 = vpack.c.b16 %v1004, %v1003
  %v1033 = vpack.c.b16 %v1006, %v1005
  %v1034 = vpack.c.b16 %v1008, %v1007
  %v1035 = vpack.c.b16 %v1010, %v1009
  %v1036 = vpack.c.b16 %v1012, %v1011
  %v1037 = vpack.c.b16 %v1014, %v1013
  %v1038 = vpack.c.b16 %v1016, %v1015
  %v1039 = vpack.c.b16 %v1018, %v1017
  %v1040 = vpack.c.b16 %v1020, %v1019
  %v1041 = vpack.c.b16 %v1022, %v1021
  %v1042 = vpack.c.b16 %v1024, %v1023
  %v1043 = vpack.c.b16 %v1026, %v1025
  %v1044 = vpack.c.b16 %v1028, %v1027
  %1061 = vmatprep.subr.bf16.mxu0 0
  %1062 = vmatpush1.bf16.msra.mxu0 %v1029
  %1063 = vmatprep.subr.bf16.mxu0 0
  %1064 = vmatpush1.bf16.msra.mxu0 %v1030
  %1065 = vmatprep.subr.bf16.mxu0 0
  %1066 = vmatpush1.bf16.msra.mxu0 %v1031
  %1067 = vmatprep.subr.bf16.mxu0 0
  %1068 = vmatpush1.bf16.msra.mxu0 %v1032
  %1069 = vmatprep.subr.bf16.mxu0 0
  %1070 = vmatpush1.bf16.msra.mxu0 %v1033
  %1071 = vmatprep.subr.bf16.mxu0 0
  %1072 = vmatpush1.bf16.msra.mxu0 %v1034
  %1073 = vmatprep.subr.bf16.mxu0 0
  %1074 = vmatpush1.bf16.msra.mxu0 %v1035
  %1075 = vmatprep.subr.bf16.mxu0 0
  %1076 = vmatpush1.bf16.msra.mxu0 %v1036
  %1077 = vmatprep.subr.bf16.mxu0 0
  %1078 = vmatpush1.bf16.msra.mxu0 %v1037
  %1079 = vmatprep.subr.bf16.mxu0 0
  %1080 = vmatpush1.bf16.msra.mxu0 %v1038
  %1081 = vmatprep.subr.bf16.mxu0 0
  %1082 = vmatpush1.bf16.msra.mxu0 %v1039
  %1083 = vmatprep.subr.bf16.mxu0 0
  %1084 = vmatpush1.bf16.msra.mxu0 %v1040
  %1085 = vmatprep.subr.bf16.mxu0 0
  %1086 = vmatpush1.bf16.msra.mxu0 %v1041
  %1087 = vmatprep.subr.bf16.mxu0 0
  %1088 = vmatpush1.bf16.msra.mxu0 %v1042
  %1089 = vmatprep.subr.bf16.mxu0 0
  %1090 = vmatpush1.bf16.msra.mxu0 %v1043
  %1091 = vmatprep.subr.bf16.mxu0 0
  %1092 = vmatpush1.bf16.msra.mxu0 %v1044
  %1093 = vmatprep.mubr.bf16.mxu0 %v925
  %1094 = vmatmul.mubr.bf16.gmra.mrb[0].mxu0 %v924
  %v1095 = vpop.f32.mrb[0].mxu0
  %v1096 = vadd.f32 %v963, %v1095
  %v1097 = vpop.f32.mrb[0].mxu0
  %v1098 = vpop.f32.mrb[0].mxu0
  %v1099 = vpop.f32.mrb[0].mxu0
  %1100 = vdwg.mxu0
  %v1101 = vmax.f32 %v1096, 0.0
  %v1102 = vpack.c.bf16 %v1101, %v1101
  %v1103 = vld [vmem:[%s5] sm:$0xf]
  %v1104 = vld [vmem:[%s5 + $0x4] sm:$0xf]
  %v1105 = vld [vmem:[%s5 + $0x8] sm:$0xf]
  %v1106 = vld [vmem:[%s5 + $0xc] sm:$0xf]
  %v1107 = vld [vmem:[%s5 + $0x10] sm:$0xf]
  %v1108 = vld [vmem:[%s5 + $0x14] sm:$0xf]
  %v1109 = vld [vmem:[%s5 + $0x18] sm:$0xf]
  %v1110 = vld [vmem:[%s5 + $0x1c] sm:$0xf]
  %v1111 = vld [vmem:[%s5 + $0x20] sm:$0xf]
  %v1112 = vld [vmem:[%s5 + $0x24] sm:$0xf]
  %v1113 = vld [vmem:[%s5 + $0x28] sm:$0xf]
  %v1114 = vld [vmem:[%s5 + $0x2c] sm:$0xf]
  %v1115 = vld [vmem:[%s5 + $0x30] sm:$0xf]
  %v1116 = vld [vmem:[%s5 + $0x34] sm:$0xf]
  %v1117 = vld [vmem:[%s5 + $0x38] sm:$0xf]
  %v1118 = vld [vmem:[%s5 + $0x3c] sm:$0xf]
  %v1119 = vld [vmem:[%s6] sm:$0x1]
  %v1121 = vlaneseq
  %v1122 = vshrl.u32 %v1121, 7
  %v1123 = vsub.s32 0, %v1122
  %v1124 = vrot.slane %v1119, %v1123
  %v1142 = vunpack.c.l.b16 %v1103
  %v1143 = vunpack.c.l.b16 %v1104
  %v1144 = vunpack.c.l.b16 %v1105
  %v1145 = vunpack.c.l.b16 %v1106
  %v1146 = vunpack.c.l.b16 %v1107
  %v1147 = vunpack.c.l.b16 %v1108
  %v1148 = vunpack.c.l.b16 %v1109
  %v1149 = vunpack.c.l.b16 %v1110
  %v1150 = vunpack.c.l.b16 %v1111
  %v1151 = vunpack.c.l.b16 %v1112
  %v1152 = vunpack.c.l.b16 %v1113
  %v1153 = vunpack.c.l.b16 %v1114
  %v1154 = vunpack.c.l.b16 %v1115
  %v1155 = vunpack.c.l.b16 %v1116
  %v1156 = vunpack.c.l.b16 %v1117
  %v1157 = vunpack.c.l.b16 %v1118
  %v1158 = vpack.c.b16 %v1143, %v1142
  %v1159 = vpack.c.b16 %v1145, %v1144
  %v1160 = vpack.c.b16 %v1147, %v1146
  %v1161 = vpack.c.b16 %v1149, %v1148
  %v1162 = vpack.c.b16 %v1151, %v1150
  %v1163 = vpack.c.b16 %v1153, %v1152
  %v1164 = vpack.c.b16 %v1155, %v1154
  %v1165 = vpack.c.b16 %v1157, %v1156
  %1174 = vmatprep.subr.bf16.mxu0 0
  %1175 = vmatpush1.bf16.msra.mxu0 %v1158
  %1176 = vmatprep.subr.bf16.mxu0 0
  %1177 = vmatpush1.bf16.msra.mxu0 %v1159
  %1178 = vmatprep.subr.bf16.mxu0 0
  %1179 = vmatpush1.bf16.msra.mxu0 %v1160
  %1180 = vmatprep.subr.bf16.mxu0 0
  %1181 = vmatpush1.bf16.msra.mxu0 %v1161
  %1182 = vmatprep.subr.bf16.mxu0 0
  %1183 = vmatpush1.bf16.msra.mxu0 %v1162
  %1184 = vmatprep.subr.bf16.mxu0 0
  %1185 = vmatpush1.bf16.msra.mxu0 %v1163
  %1186 = vmatprep.subr.bf16.mxu0 0
  %1187 = vmatpush1.bf16.msra.mxu0 %v1164
  %1188 = vmatprep.subr.bf16.mxu0 0
  %1189 = vmatpush1.bf16.msra.mxu0 %v1165
  %1190 = vmatprep.subr.bf16.mxu0 0
  %1191 = vmatpush1.bf16.msra.mxu0 0
  %1192 = vmatprep.subr.bf16.mxu0 0
  %1193 = vmatpush1.bf16.msra.mxu0 0
  %1194 = vmatprep.subr.bf16.mxu0 0
  %1195 = vmatpush1.bf16.msra.mxu0 0
  %1196 = vmatprep.subr.bf16.mxu0 0
  %1197 = vmatpush1.bf16.msra.mxu0 0
  %1198 = vmatprep.subr.bf16.mxu0 0
  %1199 = vmatpush1.bf16.msra.mxu0 0
  %1200 = vmatprep.subr.bf16.mxu0 0
  %1201 = vmatpush1.bf16.msra.mxu0 0
  %1202 = vmatprep.subr.bf16.mxu0 0
  %1203 = vmatpush1.bf16.msra.mxu0 0
  %1204 = vmatprep.subr.bf16.mxu0 0
  %1205 = vmatpush1.bf16.msra.mxu0 0
  %1206 = vmatprep.mubr.bf16.mxu0 0
  %1207 = vmatmul.mubr.bf16.gmra.mrb[0].mxu0 %v1102
  %v1208 = vpop.f32.mrb[0].mxu0
  %v1209 = vadd.f32 %v1124, %v1208
  %v1210 = vpop.f32.mrb[0].mxu0
  %v1211 = vpop.f32.mrb[0].mxu0
  %v1212 = vpop.f32.mrb[0].mxu0
  %1213 = vdwg.mxu0
  %v1214 = vmax.f32 %v1209, 0.0
  %v1215 = vpack.c.bf16 %v1214, %v1214
  %v1216 = vld [vmem:[%s7] sm:$0xf]
  %v1217 = vld [vmem:[%s7 + $0x4] sm:$0xf]
  %v1218 = vld [vmem:[%s7 + $0x8] sm:$0xf]
  %v1219 = vld [vmem:[%s7 + $0xc] sm:$0xf]
  %v1220 = vld [vmem:[%s7 + $0x10] sm:$0xf]
  %v1221 = vld [vmem:[%s7 + $0x14] sm:$0xf]
  %v1222 = vld [vmem:[%s7 + $0x18] sm:$0xf]
  %v1223 = vld [vmem:[%s7 + $0x1c] sm:$0xf]
  %v1224 = vld [vmem:[%s7 + $0x20] sm:$0xf]
  %v1225 = vld [vmem:[%s7 + $0x24] sm:$0xf]
  %v1226 = vld [vmem:[%s7 + $0x28] sm:$0xf]
  %v1227 = vld [vmem:[%s7 + $0x2c] sm:$0xf]
  %v1228 = vld [vmem:[%s7 + $0x30] sm:$0xf]
  %v1229 = vld [vmem:[%s7 + $0x34] sm:$0xf]
  %v1230 = vld [vmem:[%s7 + $0x38] sm:$0xf]
  %v1231 = vld [vmem:[%s7 + $0x3c] sm:$0xf]
  %v1232 = vld [vmem:[%s8] sm:$0x1]
  %v1234 = vlaneseq
  %v1235 = vshrl.u32 %v1234, 7
  %v1236 = vsub.s32 0, %v1235
  %v1237 = vrot.slane %v1232, %v1236
  %v1255 = vunpack.c.l.b16 %v1216
  %v1256 = vunpack.c.l.b16 %v1217
  %v1257 = vunpack.c.l.b16 %v1218
  %v1258 = vunpack.c.l.b16 %v1219
  %v1259 = vunpack.c.l.b16 %v1220
  %v1260 = vunpack.c.l.b16 %v1221
  %v1261 = vunpack.c.l.b16 %v1222
  %v1262 = vunpack.c.l.b16 %v1223
  %v1263 = vunpack.c.l.b16 %v1224
  %v1264 = vunpack.c.l.b16 %v1225
  %v1265 = vunpack.c.l.b16 %v1226
  %v1266 = vunpack.c.l.b16 %v1227
  %v1267 = vunpack.c.l.b16 %v1228
  %v1268 = vunpack.c.l.b16 %v1229
  %v1269 = vunpack.c.l.b16 %v1230
  %v1270 = vunpack.c.l.b16 %v1231
  %v1271 = vpack.c.b16 %v1256, %v1255
  %v1272 = vpack.c.b16 %v1258, %v1257
  %v1273 = vpack.c.b16 %v1260, %v1259
  %v1274 = vpack.c.b16 %v1262, %v1261
  %v1275 = vpack.c.b16 %v1264, %v1263
  %v1276 = vpack.c.b16 %v1266, %v1265
  %v1277 = vpack.c.b16 %v1268, %v1267
  %v1278 = vpack.c.b16 %v1270, %v1269
  %1287 = vmatprep.subr.bf16.mxu0 0
  %1288 = vmatpush1.bf16.msra.mxu0 %v1271
  %1289 = vmatprep.subr.bf16.mxu0 0
  %1290 = vmatpush1.bf16.msra.mxu0 %v1272
  %1291 = vmatprep.subr.bf16.mxu0 0
  %1292 = vmatpush1.bf16.msra.mxu0 %v1273
  %1293 = vmatprep.subr.bf16.mxu0 0
  %1294 = vmatpush1.bf16.msra.mxu0 %v1274
  %1295 = vmatprep.subr.bf16.mxu0 0
  %1296 = vmatpush1.bf16.msra.mxu0 %v1275
  %1297 = vmatprep.subr.bf16.mxu0 0
  %1298 = vmatpush1.bf16.msra.mxu0 %v1276
  %1299 = vmatprep.subr.bf16.mxu0 0
  %1300 = vmatpush1.bf16.msra.mxu0 %v1277
  %1301 = vmatprep.subr.bf16.mxu0 0
  %1302 = vmatpush1.bf16.msra.mxu0 %v1278
  %1303 = vmatprep.subr.bf16.mxu0 0
  %1304 = vmatpush1.bf16.msra.mxu0 0
  %1305 = vmatprep.subr.bf16.mxu0 0
  %1306 = vmatpush1.bf16.msra.mxu0 0
  %1307 = vmatprep.subr.bf16.mxu0 0
  %1308 = vmatpush1.bf16.msra.mxu0 0
  %1309 = vmatprep.subr.bf16.mxu0 0
  %1310 = vmatpush1.bf16.msra.mxu0 0
  %1311 = vmatprep.subr.bf16.mxu0 0
  %1312 = vmatpush1.bf16.msra.mxu0 0
  %1313 = vmatprep.subr.bf16.mxu0 0
  %1314 = vmatpush1.bf16.msra.mxu0 0
  %1315 = vmatprep.subr.bf16.mxu0 0
  %1316 = vmatpush1.bf16.msra.mxu0 0
  %1317 = vmatprep.subr.bf16.mxu0 0
  %1318 = vmatpush1.bf16.msra.mxu0 0
  %1319 = vmatprep.mubr.bf16.mxu0 0
  %1320 = vmatmul.mubr.bf16.gmra.mrb[0].mxu0 %v1215
  %v1321 = vpop.f32.mrb[0].mxu0
  %v1322 = vadd.f32 %v1237, %v1321
  %v1323 = vpop.f32.mrb[0].mxu0
  %v1324 = vpop.f32.mrb[0].mxu0
  %v1325 = vpop.f32.mrb[0].mxu0
  %1326 = vdwg.mxu0
  %v1327 = vmax.f32 %v1322, 0.0
  %v1328 = vpack.c.bf16 %v1327, %v1327
  %v1329 = vld [vmem:[%s9] sm:$0xff]
  %v1330 = vld [vmem:[%s9 + $0x8] sm:$0xff]
  %v1331 = vld [vmem:[%s9 + $0x10] sm:$0xff]
  %v1332 = vld [vmem:[%s9 + $0x18] sm:$0xff]
  %v1333 = vld [vmem:[%s9 + $0x20] sm:$0xff]
  %v1334 = vld [vmem:[%s9 + $0x28] sm:$0xff]
  %v1335 = vld [vmem:[%s9 + $0x30] sm:$0xff]
  %v1336 = vld [vmem:[%s9 + $0x38] sm:$0xff]
  %v1337 = vld [vmem:[%s9 + $0x40] sm:$0xff]
  %v1338 = vld [vmem:[%s9 + $0x48] sm:$0xff]
  %v1339 = vld [vmem:[%s9 + $0x50] sm:$0xff]
  %v1340 = vld [vmem:[%s9 + $0x58] sm:$0xff]
  %v1341 = vld [vmem:[%s9 + $0x60] sm:$0xff]
  %v1342 = vld [vmem:[%s9 + $0x68] sm:$0xff]
  %v1343 = vld [vmem:[%s9 + $0x70] sm:$0xff]
  %v1344 = vld [vmem:[%s9 + $0x78] sm:$0xff]
  %v1345 = vld [vmem:[%s10] sm:$0x3]
  %v1347 = vlaneseq
  %v1348 = vshrl.u32 %v1347, 7
  %v1349 = vsub.s32 0, %v1348
  %v1350 = vrot.slane %v1345, %v1349
  %v1351 = vlaneseq
  %v1352 = vshrl.u32 %v1351, 7
  %v1353 = vsub.s32 1, %v1352
  %v1354 = vrot.slane %v1345, %v1353
  %v1373 = vunpack.c.l.b16 %v1329
  %v1374 = vunpack.c.h.b16 %v1329
  %v1375 = vunpack.c.l.b16 %v1330
  %v1376 = vunpack.c.h.b16 %v1330
  %v1377 = vunpack.c.l.b16 %v1331
  %v1378 = vunpack.c.h.b16 %v1331
  %v1379 = vunpack.c.l.b16 %v1332
  %v1380 = vunpack.c.h.b16 %v1332
  %v1381 = vunpack.c.l.b16 %v1333
  %v1382 = vunpack.c.h.b16 %v1333
  %v1383 = vunpack.c.l.b16 %v1334
  %v1384 = vunpack.c.h.b16 %v1334
  %v1385 = vunpack.c.l.b16 %v1335
  %v1386 = vunpack.c.h.b16 %v1335
  %v1387 = vunpack.c.l.b16 %v1336
  %v1388 = vunpack.c.h.b16 %v1336
  %v1389 = vunpack.c.l.b16 %v1337
  %v1390 = vunpack.c.h.b16 %v1337
  %v1391 = vunpack.c.l.b16 %v1338
  %v1392 = vunpack.c.h.b16 %v1338
  %v1393 = vunpack.c.l.b16 %v1339
  %v1394 = vunpack.c.h.b16 %v1339
  %v1395 = vunpack.c.l.b16 %v1340
  %v1396 = vunpack.c.h.b16 %v1340
  %v1397 = vunpack.c.l.b16 %v1341
  %v1398 = vunpack.c.h.b16 %v1341
  %v1399 = vunpack.c.l.b16 %v1342
  %v1400 = vunpack.c.h.b16 %v1342
  %v1401 = vunpack.c.l.b16 %v1343
  %v1402 = vunpack.c.h.b16 %v1343
  %v1403 = vunpack.c.l.b16 %v1344
  %v1404 = vunpack.c.h.b16 %v1344
  %v1405 = vpack.c.b16 %v1375, %v1373
  %v1406 = vpack.c.b16 %v1376, %v1374
  %v1407 = vpack.c.b16 %v1379, %v1377
  %v1408 = vpack.c.b16 %v1380, %v1378
  %v1409 = vpack.c.b16 %v1383, %v1381
  %v1410 = vpack.c.b16 %v1384, %v1382
  %v1411 = vpack.c.b16 %v1387, %v1385
  %v1412 = vpack.c.b16 %v1388, %v1386
  %v1413 = vpack.c.b16 %v1391, %v1389
  %v1414 = vpack.c.b16 %v1392, %v1390
  %v1415 = vpack.c.b16 %v1395, %v1393
  %v1416 = vpack.c.b16 %v1396, %v1394
  %v1417 = vpack.c.b16 %v1399, %v1397
  %v1418 = vpack.c.b16 %v1400, %v1398
  %v1419 = vpack.c.b16 %v1403, %v1401
  %v1420 = vpack.c.b16 %v1404, %v1402
  %1437 = vmatprep.subr.bf16.mxu0 %v1406
  %1438 = vmatpush1.bf16.msra.mxu0 %v1405
  %1439 = vmatprep.subr.bf16.mxu0 %v1408
  %1440 = vmatpush1.bf16.msra.mxu0 %v1407
  %1441 = vmatprep.subr.bf16.mxu0 %v1410
  %1442 = vmatpush1.bf16.msra.mxu0 %v1409
  %1443 = vmatprep.subr.bf16.mxu0 %v1412
  %1444 = vmatpush1.bf16.msra.mxu0 %v1411
  %1445 = vmatprep.subr.bf16.mxu0 %v1414
  %1446 = vmatpush1.bf16.msra.mxu0 %v1413
  %1447 = vmatprep.subr.bf16.mxu0 %v1416
  %1448 = vmatpush1.bf16.msra.mxu0 %v1415
  %1449 = vmatprep.subr.bf16.mxu0 %v1418
  %1450 = vmatpush1.bf16.msra.mxu0 %v1417
  %1451 = vmatprep.subr.bf16.mxu0 %v1420
  %1452 = vmatpush1.bf16.msra.mxu0 %v1419
  %1453 = vmatprep.subr.bf16.mxu0 0
  %1454 = vmatpush1.bf16.msra.mxu0 0
  %1455 = vmatprep.subr.bf16.mxu0 0
  %1456 = vmatpush1.bf16.msra.mxu0 0
  %1457 = vmatprep.subr.bf16.mxu0 0
  %1458 = vmatpush1.bf16.msra.mxu0 0
  %1459 = vmatprep.subr.bf16.mxu0 0
  %1460 = vmatpush1.bf16.msra.mxu0 0
  %1461 = vmatprep.subr.bf16.mxu0 0
  %1462 = vmatpush1.bf16.msra.mxu0 0
  %1463 = vmatprep.subr.bf16.mxu0 0
  %1464 = vmatpush1.bf16.msra.mxu0 0
  %1465 = vmatprep.subr.bf16.mxu0 0
  %1466 = vmatpush1.bf16.msra.mxu0 0
  %1467 = vmatprep.subr.bf16.mxu0 0
  %1468 = vmatpush1.bf16.msra.mxu0 0
  %1469 = vmatprep.mubr.bf16.mxu0 0
  %1470 = vmatmul.mubr.bf16.gmra.mrb[0].mxu0 %v1328
  %v1471 = vpop.f32.mrb[0].mxu0
  %v1472 = vadd.f32 %v1350, %v1471
  %v1473 = vpop.f32.mrb[0].mxu0
  %v1474 = vadd.f32 %v1354, %v1473
  %v1475 = vpop.f32.mrb[0].mxu0
  %v1476 = vpop.f32.mrb[0].mxu0
  %1477 = vdwg.mxu0
  %v1478 = vmax.f32 %v1472, 0.0
  %v1479 = vmax.f32 %v1474, 0.0
  %v1480 = vpack.c.bf16 %v1478, %v1478
  %v1481 = vpack.c.bf16 %v1479, %v1479
  %v1482 = vld [vmem:[%s11] sm:$0xff]
  %v1483 = vld [vmem:[%s11 + $0x8] sm:$0xff]
  %v1484 = vld [vmem:[%s11 + $0x10] sm:$0xff]
  %v1485 = vld [vmem:[%s11 + $0x18] sm:$0xf]
  %v1486 = vld [vmem:[%s11 + $0x1c] sm:$0xff]
  %v1487 = vld [vmem:[%s11 + $0x24] sm:$0xff]
  %v1488 = vld [vmem:[%s11 + $0x2c] sm:$0xff]
  %v1489 = vld [vmem:[%s11 + $0x34] sm:$0xf]
  %v1490 = vld [vmem:[%s11 + $0x38] sm:$0xff]
  %v1491 = vld [vmem:[%s11 + $0x40] sm:$0xff]
  %v1492 = vld [vmem:[%s11 + $0x48] sm:$0xff]
  %v1493 = vld [vmem:[%s11 + $0x50] sm:$0xf]
  %v1494 = vld [vmem:[%s11 + $0x54] sm:$0xff]
  %v1495 = vld [vmem:[%s11 + $0x5c] sm:$0xff]
  %v1496 = vld [vmem:[%s11 + $0x64] sm:$0xff]
  %v1497 = vld [vmem:[%s11 + $0x6c] sm:$0xf]
  %v1498 = vld [vmem:[%s11 + $0x70] sm:$0xff]
  %v1499 = vld [vmem:[%s11 + $0x78] sm:$0xff]
  %v1500 = vld [vmem:[%s11 + $0x80] sm:$0xff]
  %v1501 = vld [vmem:[%s11 + $0x88] sm:$0xf]
  %v1502 = vld [vmem:[%s11 + $0x8c] sm:$0xff]
  %v1503 = vld [vmem:[%s11 + $0x94] sm:$0xff]
  %v1504 = vld [vmem:[%s11 + $0x9c] sm:$0xff]
  %v1505 = vld [vmem:[%s11 + $0xa4] sm:$0xf]
  %v1506 = vld [vmem:[%s11 + $0xa8] sm:$0xff]
  %v1507 = vld [vmem:[%s11 + $0xb0] sm:$0xff]
  %v1508 = vld [vmem:[%s11 + $0xb8] sm:$0xff]
  %v1509 = vld [vmem:[%s11 + $0xc0] sm:$0xf]
  %v1510 = vld [vmem:[%s11 + $0xc4] sm:$0xff]
  %v1511 = vld [vmem:[%s11 + $0xcc] sm:$0xff]
  %v1512 = vld [vmem:[%s11 + $0xd4] sm:$0xff]
  %v1513 = vld [vmem:[%s11 + $0xdc] sm:$0xf]
  %v1514 = vld [vmem:[%s11 + $0xe0] sm:$0xff]
  %v1515 = vld [vmem:[%s11 + $0xe8] sm:$0xff]
  %v1516 = vld [vmem:[%s11 + $0xf0] sm:$0xff]
  %v1517 = vld [vmem:[%s11 + $0xf8] sm:$0xf]
  %v1518 = vld [vmem:[%s11 + $0xfc] sm:$0xff]
  %v1519 = vld [vmem:[%s11 + $0x104] sm:$0xff]
  %v1520 = vld [vmem:[%s11 + $0x10c] sm:$0xff]
  %v1521 = vld [vmem:[%s11 + $0x114] sm:$0xf]
  %v1522 = vld [vmem:[%s11 + $0x118] sm:$0xff]
  %v1523 = vld [vmem:[%s11 + $0x120] sm:$0xff]
  %v1524 = vld [vmem:[%s11 + $0x128] sm:$0xff]
  %v1525 = vld [vmem:[%s11 + $0x130] sm:$0xf]
  %v1526 = vld [vmem:[%s11 + $0x134] sm:$0xff]
  %v1527 = vld [vmem:[%s11 + $0x13c] sm:$0xff]
  %v1528 = vld [vmem:[%s11 + $0x144] sm:$0xff]
  %v1529 = vld [vmem:[%s11 + $0x14c] sm:$0xf]
  %v1530 = vld [vmem:[%s11 + $0x150] sm:$0xff]
  %v1531 = vld [vmem:[%s11 + $0x158] sm:$0xff]
  %v1532 = vld [vmem:[%s11 + $0x160] sm:$0xff]
  %v1533 = vld [vmem:[%s11 + $0x168] sm:$0xf]
  %v1534 = vld [vmem:[%s11 + $0x16c] sm:$0xff]
  %v1535 = vld [vmem:[%s11 + $0x174] sm:$0xff]
  %v1536 = vld [vmem:[%s11 + $0x17c] sm:$0xff]
  %v1537 = vld [vmem:[%s11 + $0x184] sm:$0xf]
  %v1538 = vld [vmem:[%s11 + $0x188] sm:$0xff]
  %v1539 = vld [vmem:[%s11 + $0x190] sm:$0xff]
  %v1540 = vld [vmem:[%s11 + $0x198] sm:$0xff]
  %v1541 = vld [vmem:[%s11 + $0x1a0] sm:$0xf]
  %v1542 = vld [vmem:[%s11 + $0x1a4] sm:$0xff]
  %v1543 = vld [vmem:[%s11 + $0x1ac] sm:$0xff]
  %v1544 = vld [vmem:[%s11 + $0x1b4] sm:$0xff]
  %v1545 = vld [vmem:[%s11 + $0x1bc] sm:$0xf]
  %v1546 = vld [vmem:[%s11 + $0x1c0] sm:$0xff]
  %v1547 = vld [vmem:[%s11 + $0x1c8] sm:$0xff]
  %v1548 = vld [vmem:[%s11 + $0x1d0] sm:$0xff]
  %v1549 = vld [vmem:[%s11 + $0x1d8] sm:$0xf]
  %v1550 = vld [vmem:[%s11 + $0x1dc] sm:$0xff]
  %v1551 = vld [vmem:[%s11 + $0x1e4] sm:$0xff]
  %v1552 = vld [vmem:[%s11 + $0x1ec] sm:$0xff]
  %v1553 = vld [vmem:[%s11 + $0x1f4] sm:$0xf]
  %v1554 = vld [vmem:[%s11 + $0x1f8] sm:$0xff]
  %v1555 = vld [vmem:[%s11 + $0x200] sm:$0xff]
  %v1556 = vld [vmem:[%s11 + $0x208] sm:$0xff]
  %v1557 = vld [vmem:[%s11 + $0x210] sm:$0xf]
  %v1558 = vld [vmem:[%s11 + $0x214] sm:$0xff]
  %v1559 = vld [vmem:[%s11 + $0x21c] sm:$0xff]
  %v1560 = vld [vmem:[%s11 + $0x224] sm:$0xff]
  %v1561 = vld [vmem:[%s11 + $0x22c] sm:$0xf]
  %v1562 = vld [vmem:[%s11 + $0x230] sm:$0xff]
  %v1563 = vld [vmem:[%s11 + $0x238] sm:$0xff]
  %v1564 = vld [vmem:[%s11 + $0x240] sm:$0xff]
  %v1565 = vld [vmem:[%s11 + $0x248] sm:$0xf]
  %v1566 = vld [vmem:[%s11 + $0x24c] sm:$0xff]
  %v1567 = vld [vmem:[%s11 + $0x254] sm:$0xff]
  %v1568 = vld [vmem:[%s11 + $0x25c] sm:$0xff]
  %v1569 = vld [vmem:[%s11 + $0x264] sm:$0xf]
  %v1570 = vld [vmem:[%s11 + $0x268] sm:$0xff]
  %v1571 = vld [vmem:[%s11 + $0x270] sm:$0xff]
  %v1572 = vld [vmem:[%s11 + $0x278] sm:$0xff]
  %v1573 = vld [vmem:[%s11 + $0x280] sm:$0xf]
  %v1574 = vld [vmem:[%s11 + $0x284] sm:$0xff]
  %v1575 = vld [vmem:[%s11 + $0x28c] sm:$0xff]
  %v1576 = vld [vmem:[%s11 + $0x294] sm:$0xff]
  %v1577 = vld [vmem:[%s11 + $0x29c] sm:$0xf]
  %v1578 = vld [vmem:[%s11 + $0x2a0] sm:$0xff]
  %v1579 = vld [vmem:[%s11 + $0x2a8] sm:$0xff]
  %v1580 = vld [vmem:[%s11 + $0x2b0] sm:$0xff]
  %v1581 = vld [vmem:[%s11 + $0x2b8] sm:$0xf]
  %v1582 = vld [vmem:[%s11 + $0x2bc] sm:$0xff]
  %v1583 = vld [vmem:[%s11 + $0x2c4] sm:$0xff]
  %v1584 = vld [vmem:[%s11 + $0x2cc] sm:$0xff]
  %v1585 = vld [vmem:[%s11 + $0x2d4] sm:$0xf]
  %v1586 = vld [vmem:[%s11 + $0x2d8] sm:$0xff]
  %v1587 = vld [vmem:[%s11 + $0x2e0] sm:$0xff]
  %v1588 = vld [vmem:[%s11 + $0x2e8] sm:$0xff]
  %v1589 = vld [vmem:[%s11 + $0x2f0] sm:$0xf]
  %v1590 = vld [vmem:[%s11 + $0x2f4] sm:$0xff]
  %v1591 = vld [vmem:[%s11 + $0x2fc] sm:$0xff]
  %v1592 = vld [vmem:[%s11 + $0x304] sm:$0xff]
  %v1593 = vld [vmem:[%s11 + $0x30c] sm:$0xf]
  %v1594 = vld [vmem:[%s11 + $0x310] sm:$0xff]
  %v1595 = vld [vmem:[%s11 + $0x318] sm:$0xff]
  %v1596 = vld [vmem:[%s11 + $0x320] sm:$0xff]
  %v1597 = vld [vmem:[%s11 + $0x328] sm:$0xf]
  %v1598 = vld [vmem:[%s11 + $0x32c] sm:$0xff]
  %v1599 = vld [vmem:[%s11 + $0x334] sm:$0xff]
  %v1600 = vld [vmem:[%s11 + $0x33c] sm:$0xff]
  %v1601 = vld [vmem:[%s11 + $0x344] sm:$0xf]
  %v1602 = vld [vmem:[%s11 + $0x348] sm:$0xff]
  %v1603 = vld [vmem:[%s11 + $0x350] sm:$0xff]
  %v1604 = vld [vmem:[%s11 + $0x358] sm:$0xff]
  %v1605 = vld [vmem:[%s11 + $0x360] sm:$0xf]
  %v1606 = vld [vmem:[%s11 + $0x364] sm:$0xff]
  %v1607 = vld [vmem:[%s11 + $0x36c] sm:$0xff]
  %v1608 = vld [vmem:[%s11 + $0x374] sm:$0xff]
  %v1609 = vld [vmem:[%s11 + $0x37c] sm:$0xf]
  %v1610 = vld [vmem:[%s12] sm:$0x7f]
  %v1612 = vlaneseq
  %v1613 = vshrl.u32 %v1612, 7
  %v1614 = vsub.s32 0, %v1613
  %v1615 = vrot.slane %v1610, %v1614
  %v1616 = vlaneseq
  %v1617 = vshrl.u32 %v1616, 7
  %v1618 = vsub.s32 1, %v1617
  %v1619 = vrot.slane %v1610, %v1618
  %v1620 = vlaneseq
  %v1621 = vshrl.u32 %v1620, 7
  %v1622 = vsub.s32 2, %v1621
  %v1623 = vrot.slane %v1610, %v1622
  %v1624 = vlaneseq
  %v1625 = vshrl.u32 %v1624, 7
  %v1626 = vsub.s32 3, %v1625
  %v1627 = vrot.slane %v1610, %v1626
  %v1628 = vlaneseq
  %v1629 = vshrl.u32 %v1628, 7
  %v1630 = vsub.s32 4, %v1629
  %v1631 = vrot.slane %v1610, %v1630
  %v1632 = vlaneseq
  %v1633 = vshrl.u32 %v1632, 7
  %v1634 = vsub.s32 5, %v1633
  %v1635 = vrot.slane %v1610, %v1634
  %v1636 = vlaneseq
  %v1637 = vshrl.u32 %v1636, 7
  %v1638 = vsub.s32 6, %v1637
  %v1639 = vrot.slane %v1610, %v1638
  %v1775 = vunpack.c.l.b16 %v1482
  %v1776 = vunpack.c.h.b16 %v1482
  %v1777 = vunpack.c.l.b16 %v1483
  %v1778 = vunpack.c.h.b16 %v1483
  %v1779 = vunpack.c.l.b16 %v1484
  %v1780 = vunpack.c.h.b16 %v1484
  %v1781 = vunpack.c.l.b16 %v1485
  %v1782 = vunpack.c.l.b16 %v1486
  %v1783 = vunpack.c.h.b16 %v1486
  %v1784 = vunpack.c.l.b16 %v1487
  %v1785 = vunpack.c.h.b16 %v1487
  %v1786 = vunpack.c.l.b16 %v1488
  %v1787 = vunpack.c.h.b16 %v1488
  %v1788 = vunpack.c.l.b16 %v1489
  %v1789 = vunpack.c.l.b16 %v1490
  %v1790 = vunpack.c.h.b16 %v1490
  %v1791 = vunpack.c.l.b16 %v1491
  %v1792 = vunpack.c.h.b16 %v1491
  %v1793 = vunpack.c.l.b16 %v1492
  %v1794 = vunpack.c.h.b16 %v1492
  %v1795 = vunpack.c.l.b16 %v1493
  %v1796 = vunpack.c.l.b16 %v1494
  %v1797 = vunpack.c.h.b16 %v1494
  %v1798 = vunpack.c.l.b16 %v1495
  %v1799 = vunpack.c.h.b16 %v1495
  %v1800 = vunpack.c.l.b16 %v1496
  %v1801 = vunpack.c.h.b16 %v1496
  %v1802 = vunpack.c.l.b16 %v1497
  %v1803 = vunpack.c.l.b16 %v1498
  %v1804 = vunpack.c.h.b16 %v1498
  %v1805 = vunpack.c.l.b16 %v1499
  %v1806 = vunpack.c.h.b16 %v1499
  %v1807 = vunpack.c.l.b16 %v1500
  %v1808 = vunpack.c.h.b16 %v1500
  %v1809 = vunpack.c.l.b16 %v1501
  %v1810 = vunpack.c.l.b16 %v1502
  %v1811 = vunpack.c.h.b16 %v1502
  %v1812 = vunpack.c.l.b16 %v1503
  %v1813 = vunpack.c.h.b16 %v1503
  %v1814 = vunpack.c.l.b16 %v1504
  %v1815 = vunpack.c.h.b16 %v1504
  %v1816 = vunpack.c.l.b16 %v1505
  %v1817 = vunpack.c.l.b16 %v1506
  %v1818 = vunpack.c.h.b16 %v1506
  %v1819 = vunpack.c.l.b16 %v1507
  %v1820 = vunpack.c.h.b16 %v1507
  %v1821 = vunpack.c.l.b16 %v1508
  %v1822 = vunpack.c.h.b16 %v1508
  %v1823 = vunpack.c.l.b16 %v1509
  %v1824 = vunpack.c.l.b16 %v1510
  %v1825 = vunpack.c.h.b16 %v1510
  %v1826 = vunpack.c.l.b16 %v1511
  %v1827 = vunpack.c.h.b16 %v1511
  %v1828 = vunpack.c.l.b16 %v1512
  %v1829 = vunpack.c.h.b16 %v1512
  %v1830 = vunpack.c.l.b16 %v1513
  %v1831 = vunpack.c.l.b16 %v1514
  %v1832 = vunpack.c.h.b16 %v1514
  %v1833 = vunpack.c.l.b16 %v1515
  %v1834 = vunpack.c.h.b16 %v1515
  %v1835 = vunpack.c.l.b16 %v1516
  %v1836 = vunpack.c.h.b16 %v1516
  %v1837 = vunpack.c.l.b16 %v1517
  %v1838 = vunpack.c.l.b16 %v1518
  %v1839 = vunpack.c.h.b16 %v1518
  %v1840 = vunpack.c.l.b16 %v1519
  %v1841 = vunpack.c.h.b16 %v1519
  %v1842 = vunpack.c.l.b16 %v1520
  %v1843 = vunpack.c.h.b16 %v1520
  %v1844 = vunpack.c.l.b16 %v1521
  %v1845 = vunpack.c.l.b16 %v1522
  %v1846 = vunpack.c.h.b16 %v1522
  %v1847 = vunpack.c.l.b16 %v1523
  %v1848 = vunpack.c.h.b16 %v1523
  %v1849 = vunpack.c.l.b16 %v1524
  %v1850 = vunpack.c.h.b16 %v1524
  %v1851 = vunpack.c.l.b16 %v1525
  %v1852 = vunpack.c.l.b16 %v1526
  %v1853 = vunpack.c.h.b16 %v1526
  %v1854 = vunpack.c.l.b16 %v1527
  %v1855 = vunpack.c.h.b16 %v1527
  %v1856 = vunpack.c.l.b16 %v1528
  %v1857 = vunpack.c.h.b16 %v1528
  %v1858 = vunpack.c.l.b16 %v1529
  %v1859 = vunpack.c.l.b16 %v1530
  %v1860 = vunpack.c.h.b16 %v1530
  %v1861 = vunpack.c.l.b16 %v1531
  %v1862 = vunpack.c.h.b16 %v1531
  %v1863 = vunpack.c.l.b16 %v1532
  %v1864 = vunpack.c.h.b16 %v1532
  %v1865 = vunpack.c.l.b16 %v1533
  %v1866 = vunpack.c.l.b16 %v1534
  %v1867 = vunpack.c.h.b16 %v1534
  %v1868 = vunpack.c.l.b16 %v1535
  %v1869 = vunpack.c.h.b16 %v1535
  %v1870 = vunpack.c.l.b16 %v1536
  %v1871 = vunpack.c.h.b16 %v1536
  %v1872 = vunpack.c.l.b16 %v1537
  %v1873 = vunpack.c.l.b16 %v1538
  %v1874 = vunpack.c.h.b16 %v1538
  %v1875 = vunpack.c.l.b16 %v1539
  %v1876 = vunpack.c.h.b16 %v1539
  %v1877 = vunpack.c.l.b16 %v1540
  %v1878 = vunpack.c.h.b16 %v1540
  %v1879 = vunpack.c.l.b16 %v1541
  %v1880 = vunpack.c.l.b16 %v1542
  %v1881 = vunpack.c.h.b16 %v1542
  %v1882 = vunpack.c.l.b16 %v1543
  %v1883 = vunpack.c.h.b16 %v1543
  %v1884 = vunpack.c.l.b16 %v1544
  %v1885 = vunpack.c.h.b16 %v1544
  %v1886 = vunpack.c.l.b16 %v1545
  %v1887 = vunpack.c.l.b16 %v1546
  %v1888 = vunpack.c.h.b16 %v1546
  %v1889 = vunpack.c.l.b16 %v1547
  %v1890 = vunpack.c.h.b16 %v1547
  %v1891 = vunpack.c.l.b16 %v1548
  %v1892 = vunpack.c.h.b16 %v1548
  %v1893 = vunpack.c.l.b16 %v1549
  %v1894 = vunpack.c.l.b16 %v1550
  %v1895 = vunpack.c.h.b16 %v1550
  %v1896 = vunpack.c.l.b16 %v1551
  %v1897 = vunpack.c.h.b16 %v1551
  %v1898 = vunpack.c.l.b16 %v1552
  %v1899 = vunpack.c.h.b16 %v1552
  %v1900 = vunpack.c.l.b16 %v1553
  %v1901 = vunpack.c.l.b16 %v1554
  %v1902 = vunpack.c.h.b16 %v1554
  %v1903 = vunpack.c.l.b16 %v1555
  %v1904 = vunpack.c.h.b16 %v1555
  %v1905 = vunpack.c.l.b16 %v1556
  %v1906 = vunpack.c.h.b16 %v1556
  %v1907 = vunpack.c.l.b16 %v1557
  %v1908 = vunpack.c.l.b16 %v1558
  %v1909 = vunpack.c.h.b16 %v1558
  %v1910 = vunpack.c.l.b16 %v1559
  %v1911 = vunpack.c.h.b16 %v1559
  %v1912 = vunpack.c.l.b16 %v1560
  %v1913 = vunpack.c.h.b16 %v1560
  %v1914 = vunpack.c.l.b16 %v1561
  %v1915 = vunpack.c.l.b16 %v1562
  %v1916 = vunpack.c.h.b16 %v1562
  %v1917 = vunpack.c.l.b16 %v1563
  %v1918 = vunpack.c.h.b16 %v1563
  %v1919 = vunpack.c.l.b16 %v1564
  %v1920 = vunpack.c.h.b16 %v1564
  %v1921 = vunpack.c.l.b16 %v1565
  %v1922 = vunpack.c.l.b16 %v1566
  %v1923 = vunpack.c.h.b16 %v1566
  %v1924 = vunpack.c.l.b16 %v1567
  %v1925 = vunpack.c.h.b16 %v1567
  %v1926 = vunpack.c.l.b16 %v1568
  %v1927 = vunpack.c.h.b16 %v1568
  %v1928 = vunpack.c.l.b16 %v1569
  %v1929 = vunpack.c.l.b16 %v1570
  %v1930 = vunpack.c.h.b16 %v1570
  %v1931 = vunpack.c.l.b16 %v1571
  %v1932 = vunpack.c.h.b16 %v1571
  %v1933 = vunpack.c.l.b16 %v1572
  %v1934 = vunpack.c.h.b16 %v1572
  %v1935 = vunpack.c.l.b16 %v1573
  %v1936 = vunpack.c.l.b16 %v1574
  %v1937 = vunpack.c.h.b16 %v1574
  %v1938 = vunpack.c.l.b16 %v1575
  %v1939 = vunpack.c.h.b16 %v1575
  %v1940 = vunpack.c.l.b16 %v1576
  %v1941 = vunpack.c.h.b16 %v1576
  %v1942 = vunpack.c.l.b16 %v1577
  %v1943 = vunpack.c.l.b16 %v1578
  %v1944 = vunpack.c.h.b16 %v1578
  %v1945 = vunpack.c.l.b16 %v1579
  %v1946 = vunpack.c.h.b16 %v1579
  %v1947 = vunpack.c.l.b16 %v1580
  %v1948 = vunpack.c.h.b16 %v1580
  %v1949 = vunpack.c.l.b16 %v1581
  %v1950 = vunpack.c.l.b16 %v1582
  %v1951 = vunpack.c.h.b16 %v1582
  %v1952 = vunpack.c.l.b16 %v1583
  %v1953 = vunpack.c.h.b16 %v1583
  %v1954 = vunpack.c.l.b16 %v1584
  %v1955 = vunpack.c.h.b16 %v1584
  %v1956 = vunpack.c.l.b16 %v1585
  %v1957 = vunpack.c.l.b16 %v1586
  %v1958 = vunpack.c.h.b16 %v1586
  %v1959 = vunpack.c.l.b16 %v1587
  %v1960 = vunpack.c.h.b16 %v1587
  %v1961 = vunpack.c.l.b16 %v1588
  %v1962 = vunpack.c.h.b16 %v1588
  %v1963 = vunpack.c.l.b16 %v1589
  %v1964 = vunpack.c.l.b16 %v1590
  %v1965 = vunpack.c.h.b16 %v1590
  %v1966 = vunpack.c.l.b16 %v1591
  %v1967 = vunpack.c.h.b16 %v1591
  %v1968 = vunpack.c.l.b16 %v1592
  %v1969 = vunpack.c.h.b16 %v1592
  %v1970 = vunpack.c.l.b16 %v1593
  %v1971 = vunpack.c.l.b16 %v1594
  %v1972 = vunpack.c.h.b16 %v1594
  %v1973 = vunpack.c.l.b16 %v1595
  %v1974 = vunpack.c.h.b16 %v1595
  %v1975 = vunpack.c.l.b16 %v1596
  %v1976 = vunpack.c.h.b16 %v1596
  %v1977 = vunpack.c.l.b16 %v1597
  %v1978 = vunpack.c.l.b16 %v1598
  %v1979 = vunpack.c.h.b16 %v1598
  %v1980 = vunpack.c.l.b16 %v1599
  %v1981 = vunpack.c.h.b16 %v1599
  %v1982 = vunpack.c.l.b16 %v1600
  %v1983 = vunpack.c.h.b16 %v1600
  %v1984 = vunpack.c.l.b16 %v1601
  %v1985 = vunpack.c.l.b16 %v1602
  %v1986 = vunpack.c.h.b16 %v1602
  %v1987 = vunpack.c.l.b16 %v1603
  %v1988 = vunpack.c.h.b16 %v1603
  %v1989 = vunpack.c.l.b16 %v1604
  %v1990 = vunpack.c.h.b16 %v1604
  %v1991 = vunpack.c.l.b16 %v1605
  %v1992 = vunpack.c.l.b16 %v1606
  %v1993 = vunpack.c.h.b16 %v1606
  %v1994 = vunpack.c.l.b16 %v1607
  %v1995 = vunpack.c.h.b16 %v1607
  %v1996 = vunpack.c.l.b16 %v1608
  %v1997 = vunpack.c.h.b16 %v1608
  %v1998 = vunpack.c.l.b16 %v1609
  %v1999 = vpack.c.b16 %v1782, %v1775
  %v2000 = vpack.c.b16 %v1783, %v1776
  %v2001 = vpack.c.b16 %v1784, %v1777
  %v2002 = vpack.c.b16 %v1785, %v1778
  %v2003 = vpack.c.b16 %v1786, %v1779
  %v2004 = vpack.c.b16 %v1787, %v1780
  %v2005 = vpack.c.b16 %v1788, %v1781
  %v2006 = vpack.c.b16 %v1796, %v1789
  %v2007 = vpack.c.b16 %v1797, %v1790
  %v2008 = vpack.c.b16 %v1798, %v1791
  %v2009 = vpack.c.b16 %v1799, %v1792
  %v2010 = vpack.c.b16 %v1800, %v1793
  %v2011 = vpack.c.b16 %v1801, %v1794
  %v2012 = vpack.c.b16 %v1802, %v1795
  %v2013 = vpack.c.b16 %v1810, %v1803
  %v2014 = vpack.c.b16 %v1811, %v1804
  %v2015 = vpack.c.b16 %v1812, %v1805
  %v2016 = vpack.c.b16 %v1813, %v1806
  %v2017 = vpack.c.b16 %v1814, %v1807
  %v2018 = vpack.c.b16 %v1815, %v1808
  %v2019 = vpack.c.b16 %v1816, %v1809
  %v2020 = vpack.c.b16 %v1824, %v1817
  %v2021 = vpack.c.b16 %v1825, %v1818
  %v2022 = vpack.c.b16 %v1826, %v1819
  %v2023 = vpack.c.b16 %v1827, %v1820
  %v2024 = vpack.c.b16 %v1828, %v1821
  %v2025 = vpack.c.b16 %v1829, %v1822
  %v2026 = vpack.c.b16 %v1830, %v1823
  %v2027 = vpack.c.b16 %v1838, %v1831
  %v2028 = vpack.c.b16 %v1839, %v1832
  %v2029 = vpack.c.b16 %v1840, %v1833
  %v2030 = vpack.c.b16 %v1841, %v1834
  %v2031 = vpack.c.b16 %v1842, %v1835
  %v2032 = vpack.c.b16 %v1843, %v1836
  %v2033 = vpack.c.b16 %v1844, %v1837
  %v2034 = vpack.c.b16 %v1852, %v1845
  %v2035 = vpack.c.b16 %v1853, %v1846
  %v2036 = vpack.c.b16 %v1854, %v1847
  %v2037 = vpack.c.b16 %v1855, %v1848
  %v2038 = vpack.c.b16 %v1856, %v1849
  %v2039 = vpack.c.b16 %v1857, %v1850
  %v2040 = vpack.c.b16 %v1858, %v1851
  %v2041 = vpack.c.b16 %v1866, %v1859
  %v2042 = vpack.c.b16 %v1867, %v1860
  %v2043 = vpack.c.b16 %v1868, %v1861
  %v2044 = vpack.c.b16 %v1869, %v1862
  %v2045 = vpack.c.b16 %v1870, %v1863
  %v2046 = vpack.c.b16 %v1871, %v1864
  %v2047 = vpack.c.b16 %v1872, %v1865
  %v2048 = vpack.c.b16 %v1880, %v1873
  %v2049 = vpack.c.b16 %v1881, %v1874
  %v2050 = vpack.c.b16 %v1882, %v1875
  %v2051 = vpack.c.b16 %v1883, %v1876
  %v2052 = vpack.c.b16 %v1884, %v1877
  %v2053 = vpack.c.b16 %v1885, %v1878
  %v2054 = vpack.c.b16 %v1886, %v1879
  %v2055 = vpack.c.b16 %v1894, %v1887
  %v2056 = vpack.c.b16 %v1895, %v1888
  %v2057 = vpack.c.b16 %v1896, %v1889
  %v2058 = vpack.c.b16 %v1897, %v1890
  %v2059 = vpack.c.b16 %v1898, %v1891
  %v2060 = vpack.c.b16 %v1899, %v1892
  %v2061 = vpack.c.b16 %v1900, %v1893
  %v2062 = vpack.c.b16 %v1908, %v1901
  %v2063 = vpack.c.b16 %v1909, %v1902
  %v2064 = vpack.c.b16 %v1910, %v1903
  %v2065 = vpack.c.b16 %v1911, %v1904
  %v2066 = vpack.c.b16 %v1912, %v1905
  %v2067 = vpack.c.b16 %v1913, %v1906
  %v2068 = vpack.c.b16 %v1914, %v1907
  %v2069 = vpack.c.b16 %v1922, %v1915
  %v2070 = vpack.c.b16 %v1923, %v1916
  %v2071 = vpack.c.b16 %v1924, %v1917
  %v2072 = vpack.c.b16 %v1925, %v1918
  %v2073 = vpack.c.b16 %v1926, %v1919
  %v2074 = vpack.c.b16 %v1927, %v1920
  %v2075 = vpack.c.b16 %v1928, %v1921
  %v2076 = vpack.c.b16 %v1936, %v1929
  %v2077 = vpack.c.b16 %v1937, %v1930
  %v2078 = vpack.c.b16 %v1938, %v1931
  %v2079 = vpack.c.b16 %v1939, %v1932
  %v2080 = vpack.c.b16 %v1940, %v1933
  %v2081 = vpack.c.b16 %v1941, %v1934
  %v2082 = vpack.c.b16 %v1942, %v1935
  %v2083 = vpack.c.b16 %v1950, %v1943
  %v2084 = vpack.c.b16 %v1951, %v1944
  %v2085 = vpack.c.b16 %v1952, %v1945
  %v2086 = vpack.c.b16 %v1953, %v1946
  %v2087 = vpack.c.b16 %v1954, %v1947
  %v2088 = vpack.c.b16 %v1955, %v1948
  %v2089 = vpack.c.b16 %v1956, %v1949
  %v2090 = vpack.c.b16 %v1964, %v1957
  %v2091 = vpack.c.b16 %v1965, %v1958
  %v2092 = vpack.c.b16 %v1966, %v1959
  %v2093 = vpack.c.b16 %v1967, %v1960
  %v2094 = vpack.c.b16 %v1968, %v1961
  %v2095 = vpack.c.b16 %v1969, %v1962
  %v2096 = vpack.c.b16 %v1970, %v1963
  %v2097 = vpack.c.b16 %v1978, %v1971
  %v2098 = vpack.c.b16 %v1979, %v1972
  %v2099 = vpack.c.b16 %v1980, %v1973
  %v2100 = vpack.c.b16 %v1981, %v1974
  %v2101 = vpack.c.b16 %v1982, %v1975
  %v2102 = vpack.c.b16 %v1983, %v1976
  %v2103 = vpack.c.b16 %v1984, %v1977
  %v2104 = vpack.c.b16 %v1992, %v1985
  %v2105 = vpack.c.b16 %v1993, %v1986
  %v2106 = vpack.c.b16 %v1994, %v1987
  %v2107 = vpack.c.b16 %v1995, %v1988
  %v2108 = vpack.c.b16 %v1996, %v1989
  %v2109 = vpack.c.b16 %v1997, %v1990
  %v2110 = vpack.c.b16 %v1998, %v1991
  %2223 = vmatprep.subr.bf16.mxu0 %v2000
  %2224 = vmatpush1.bf16.msra.mxu0 %v1999
  %2225 = vmatprep.subr.bf16.mxu0 %v2007
  %2226 = vmatpush1.bf16.msra.mxu0 %v2006
  %2227 = vmatprep.subr.bf16.mxu0 %v2014
  %2228 = vmatpush1.bf16.msra.mxu0 %v2013
  %2229 = vmatprep.subr.bf16.mxu0 %v2021
  %2230 = vmatpush1.bf16.msra.mxu0 %v2020
  %2231 = vmatprep.subr.bf16.mxu0 %v2028
  %2232 = vmatpush1.bf16.msra.mxu0 %v2027
  %2233 = vmatprep.subr.bf16.mxu0 %v2035
  %2234 = vmatpush1.bf16.msra.mxu0 %v2034
  %2235 = vmatprep.subr.bf16.mxu0 %v2042
  %2236 = vmatpush1.bf16.msra.mxu0 %v2041
  %2237 = vmatprep.subr.bf16.mxu0 %v2049
  %2238 = vmatpush1.bf16.msra.mxu0 %v2048
  %2239 = vmatprep.subr.bf16.mxu0 %v2056
  %2240 = vmatpush1.bf16.msra.mxu0 %v2055
  %2241 = vmatprep.subr.bf16.mxu0 %v2063
  %2242 = vmatpush1.bf16.msra.mxu0 %v2062
  %2243 = vmatprep.subr.bf16.mxu0 %v2070
  %2244 = vmatpush1.bf16.msra.mxu0 %v2069
  %2245 = vmatprep.subr.bf16.mxu0 %v2077
  %2246 = vmatpush1.bf16.msra.mxu0 %v2076
  %2247 = vmatprep.subr.bf16.mxu0 %v2084
  %2248 = vmatpush1.bf16.msra.mxu0 %v2083
  %2249 = vmatprep.subr.bf16.mxu0 %v2091
  %2250 = vmatpush1.bf16.msra.mxu0 %v2090
  %2251 = vmatprep.subr.bf16.mxu0 %v2098
  %2252 = vmatpush1.bf16.msra.mxu0 %v2097
  %2253 = vmatprep.subr.bf16.mxu0 %v2105
  %2254 = vmatpush1.bf16.msra.mxu0 %v2104
  %2255 = vmatprep.mubr.bf16.mxu0 %v1481
  %2256 = vmatmul.mubr.bf16.gmra.mrb[0].mxu0 %v1480
  %v2257 = vpop.f32.mrb[0].mxu0
  %v2258 = vadd.f32 %v1615, %v2257
  %v2259 = vpop.f32.mrb[0].mxu0
  %v2260 = vadd.f32 %v1619, %v2259
  %v2261 = vpop.f32.mrb[0].mxu0
  %v2262 = vpop.f32.mrb[0].mxu0
  %2263 = vdwg.mxu0
  %2264 = vmatprep.subr.bf16.mxu0 %v2002
  %2265 = vmatpush1.bf16.msra.mxu0 %v2001
  %2266 = vmatprep.subr.bf16.mxu0 %v2009
  %2267 = vmatpush1.bf16.msra.mxu0 %v2008
  %2268 = vmatprep.subr.bf16.mxu0 %v2016
  %2269 = vmatpush1.bf16.msra.mxu0 %v2015
  %2270 = vmatprep.subr.bf16.mxu0 %v2023
  %2271 = vmatpush1.bf16.msra.mxu0 %v2022
  %2272 = vmatprep.subr.bf16.mxu0 %v2030
  %2273 = vmatpush1.bf16.msra.mxu0 %v2029
  %2274 = vmatprep.subr.bf16.mxu0 %v2037
  %2275 = vmatpush1.bf16.msra.mxu0 %v2036
  %2276 = vmatprep.subr.bf16.mxu0 %v2044
  %2277 = vmatpush1.bf16.msra.mxu0 %v2043
  %2278 = vmatprep.subr.bf16.mxu0 %v2051
  %2279 = vmatpush1.bf16.msra.mxu0 %v2050
  %2280 = vmatprep.subr.bf16.mxu0 %v2058
  %2281 = vmatpush1.bf16.msra.mxu0 %v2057
  %2282 = vmatprep.subr.bf16.mxu0 %v2065
  %2283 = vmatpush1.bf16.msra.mxu0 %v2064
  %2284 = vmatprep.subr.bf16.mxu0 %v2072
  %2285 = vmatpush1.bf16.msra.mxu0 %v2071
  %2286 = vmatprep.subr.bf16.mxu0 %v2079
  %2287 = vmatpush1.bf16.msra.mxu0 %v2078
  %2288 = vmatprep.subr.bf16.mxu0 %v2086
  %2289 = vmatpush1.bf16.msra.mxu0 %v2085
  %2290 = vmatprep.subr.bf16.mxu0 %v2093
  %2291 = vmatpush1.bf16.msra.mxu0 %v2092
  %2292 = vmatprep.subr.bf16.mxu0 %v2100
  %2293 = vmatpush1.bf16.msra.mxu0 %v2099
  %2294 = vmatprep.subr.bf16.mxu0 %v2107
  %2295 = vmatpush1.bf16.msra.mxu0 %v2106
  %2296 = vmatprep.mubr.bf16.mxu0 %v1481
  %2297 = vmatmul.mubr.bf16.gmra.mrb[0].mxu0 %v1480
  %v2298 = vpop.f32.mrb[0].mxu0
  %v2299 = vadd.f32 %v1623, %v2298
  %v2300 = vpop.f32.mrb[0].mxu0
  %v2301 = vadd.f32 %v1627, %v2300
  %v2302 = vpop.f32.mrb[0].mxu0
  %v2303 = vpop.f32.mrb[0].mxu0
  %2304 = vdwg.mxu0
  %2305 = vmatprep.subr.bf16.mxu0 %v2004
  %2306 = vmatpush1.bf16.msra.mxu0 %v2003
  %2307 = vmatprep.subr.bf16.mxu0 %v2011
  %2308 = vmatpush1.bf16.msra.mxu0 %v2010
  %2309 = vmatprep.subr.bf16.mxu0 %v2018
  %2310 = vmatpush1.bf16.msra.mxu0 %v2017
  %2311 = vmatprep.subr.bf16.mxu0 %v2025
  %2312 = vmatpush1.bf16.msra.mxu0 %v2024
  %2313 = vmatprep.subr.bf16.mxu0 %v2032
  %2314 = vmatpush1.bf16.msra.mxu0 %v2031
  %2315 = vmatprep.subr.bf16.mxu0 %v2039
  %2316 = vmatpush1.bf16.msra.mxu0 %v2038
  %2317 = vmatprep.subr.bf16.mxu0 %v2046
  %2318 = vmatpush1.bf16.msra.mxu0 %v2045
  %2319 = vmatprep.subr.bf16.mxu0 %v2053
  %2320 = vmatpush1.bf16.msra.mxu0 %v2052
  %2321 = vmatprep.subr.bf16.mxu0 %v2060
  %2322 = vmatpush1.bf16.msra.mxu0 %v2059
  %2323 = vmatprep.subr.bf16.mxu0 %v2067
  %2324 = vmatpush1.bf16.msra.mxu0 %v2066
  %2325 = vmatprep.subr.bf16.mxu0 %v2074
  %2326 = vmatpush1.bf16.msra.mxu0 %v2073
  %2327 = vmatprep.subr.bf16.mxu0 %v2081
  %2328 = vmatpush1.bf16.msra.mxu0 %v2080
  %2329 = vmatprep.subr.bf16.mxu0 %v2088
  %2330 = vmatpush1.bf16.msra.mxu0 %v2087
  %2331 = vmatprep.subr.bf16.mxu0 %v2095
  %2332 = vmatpush1.bf16.msra.mxu0 %v2094
  %2333 = vmatprep.subr.bf16.mxu0 %v2102
  %2334 = vmatpush1.bf16.msra.mxu0 %v2101
  %2335 = vmatprep.subr.bf16.mxu0 %v2109
  %2336 = vmatpush1.bf16.msra.mxu0 %v2108
  %2337 = vmatprep.mubr.bf16.mxu0 %v1481
  %2338 = vmatmul.mubr.bf16.gmra.mrb[0].mxu0 %v1480
  %v2339 = vpop.f32.mrb[0].mxu0
  %v2340 = vadd.f32 %v1631, %v2339
  %v2341 = vpop.f32.mrb[0].mxu0
  %v2342 = vadd.f32 %v1635, %v2341
  %v2343 = vpop.f32.mrb[0].mxu0
  %v2344 = vpop.f32.mrb[0].mxu0
  %2345 = vdwg.mxu0
  %2346 = vmatprep.subr.bf16.mxu0 0
  %2347 = vmatpush1.bf16.msra.mxu0 %v2005
  %2348 = vmatprep.subr.bf16.mxu0 0
  %2349 = vmatpush1.bf16.msra.mxu0 %v2012
  %2350 = vmatprep.subr.bf16.mxu0 0
  %2351 = vmatpush1.bf16.msra.mxu0 %v2019
  %2352 = vmatprep.subr.bf16.mxu0 0
  %2353 = vmatpush1.bf16.msra.mxu0 %v2026
  %2354 = vmatprep.subr.bf16.mxu0 0
  %2355 = vmatpush1.bf16.msra.mxu0 %v2033
  %2356 = vmatprep.subr.bf16.mxu0 0
  %2357 = vmatpush1.bf16.msra.mxu0 %v2040
  %2358 = vmatprep.subr.bf16.mxu0 0
  %2359 = vmatpush1.bf16.msra.mxu0 %v2047
  %2360 = vmatprep.subr.bf16.mxu0 0
  %2361 = vmatpush1.bf16.msra.mxu0 %v2054
  %2362 = vmatprep.subr.bf16.mxu0 0
  %2363 = vmatpush1.bf16.msra.mxu0 %v2061
  %2364 = vmatprep.subr.bf16.mxu0 0
  %2365 = vmatpush1.bf16.msra.mxu0 %v2068
  %2366 = vmatprep.subr.bf16.mxu0 0
  %2367 = vmatpush1.bf16.msra.mxu0 %v2075
  %2368 = vmatprep.subr.bf16.mxu0 0
  %2369 = vmatpush1.bf16.msra.mxu0 %v2082
  %2370 = vmatprep.subr.bf16.mxu0 0
  %2371 = vmatpush1.bf16.msra.mxu0 %v2089
  %2372 = vmatprep.subr.bf16.mxu0 0
  %2373 = vmatpush1.bf16.msra.mxu0 %v2096
  %2374 = vmatprep.subr.bf16.mxu0 0
  %2375 = vmatpush1.bf16.msra.mxu0 %v2103
  %2376 = vmatprep.subr.bf16.mxu0 0
  %2377 = vmatpush1.bf16.msra.mxu0 %v2110
  %2378 = vmatprep.mubr.bf16.mxu0 %v1481
  %2379 = vmatmul.mubr.bf16.gmra.mrb[0].mxu0 %v1480
  %v2380 = vpop.f32.mrb[0].mxu0
  %v2381 = vadd.f32 %v1639, %v2380
  %v2382 = vpop.f32.mrb[0].mxu0
  %v2383 = vpop.f32.mrb[0].mxu0
  %v2384 = vpop.f32.mrb[0].mxu0
  %2385 = vdwg.mxu0
  %v2386 = vmul.f32 %v2258, 0.5
  %v2387 = vmul.f32 %v2260, 0.5
  %v2388 = vmul.f32 %v2299, 0.5
  %v2389 = vmul.f32 %v2301, 0.5
  %v2390 = vmul.f32 %v2340, 0.5
  %v2391 = vmul.f32 %v2342, 0.5
  %v2392 = vmul.f32 %v2381, 0.5
  %v2393 = vtanh.pop %v2386
  %v2394 = vtanh.pop %v2387
  %v2395 = vtanh.pop %v2388
  %v2396 = vtanh.pop %v2389
  %v2397 = vtanh.pop %v2390
  %v2398 = vtanh.pop %v2391
  %v2399 = vtanh.pop %v2392
  %v2400 = vmul.f32 %v2393, 0.5
  %v2401 = vmul.f32 %v2394, 0.5
  %v2402 = vmul.f32 %v2395, 0.5
  %v2403 = vmul.f32 %v2396, 0.5
  %v2404 = vmul.f32 %v2397, 0.5
  %v2405 = vmul.f32 %v2398, 0.5
  %v2406 = vmul.f32 %v2399, 0.5
  %v2407 = vadd.f32 %v2400, 0.5
  %v2408 = vadd.f32 %v2401, 0.5
  %v2409 = vadd.f32 %v2402, 0.5
  %v2410 = vadd.f32 %v2403, 0.5
  %v2411 = vadd.f32 %v2404, 0.5
  %v2412 = vadd.f32 %v2405, 0.5
  %v2413 = vadd.f32 %v2406, 0.5
  %2414 = vst [vmem:[%s13] sm:$0xff] %v2407
  %2415 = vst [vmem:[%s13 + $0x8] sm:$0xff] %v2408
  %2416 = vst [vmem:[%s13 + $0x10] sm:$0xff] %v2409
  %2417 = vst [vmem:[%s13 + $0x18] sm:$0xff] %v2410
  %2418 = vst [vmem:[%s13 + $0x20] sm:$0xff] %v2411
  %2419 = vst [vmem:[%s13 + $0x28] sm:$0xff] %v2412
  %vm2420 = vcmask 130048
  %2421 = vst.msk [vmem:[%s13 + $0x30] sm:$0xff] %vm2420, %v2413
  // Predicated region
  $region54: #{ae_forward.1} parent=0 // pred_check
    _
  $region55: #{ae_forward.1} parent=0 // pred_check_branch
    %2423 = sbr.rel (0) target = $region57
  $region56: #{ae_forward.1} parent=0 // pred_region
    _
  $region57: #{ae_forward.1} parent=0 // pred_fallthru
    _
  // Predicated region
  $region58: #{ae_forward.1} parent=0 // pred_check
    _
  $region59: #{ae_forward.1} parent=0 // pred_check_branch
    %2425 = sbr.rel (0) target = $region61
  $region60: #{ae_forward.1} parent=0 // pred_region
    _
  $region61: #{ae_forward.1} parent=0 // pred_fallthru
    _

</llo_original>
